<compile_context>
chip_gen: v7x
topology: tpu7x:2x2x1
jax: 0.10.0
libtpu: 0.0.40
codegen_flags: <defaults>
</compile_context>

<pallas_src>
import functools

import jax
import jax.numpy as jnp
import numpy as np
from jax.experimental import pallas as pl
from jax.experimental.pallas import tpu as pltpu


def _round_up(n, m):
    return ((n + m - 1) // m) * m


# ----------------------------------------------------------------------------
# Parameter construction (deterministic, matches PyTorch module shapes)
# ----------------------------------------------------------------------------
def build_params(key, nhidden, num_gauss):
    """Returns (in,out)-shaped weights and (1,out)-shaped biases per layer."""
    sizes = np.linspace(20, 200, nhidden).astype(int)

    def linear_params(key, fan_in, fan_out):
        kw, kb = jax.random.split(key)
        w = jax.random.normal(kw, (fan_in, fan_out), jnp.float32) * (1.0 / np.sqrt(fan_in))
        b = jax.random.normal(kb, (1, fan_out), jnp.float32) * 0.01
        return w, b

    params = {}
    keys = jax.random.split(key, 64)
    ki = iter(range(64))

    params["in"] = [linear_params(keys[next(ki)], 7, 20)]
    params["hidden"] = [
        linear_params(keys[next(ki)], int(sizes[k]), int(sizes[k + 1]))
        for k in range(nhidden - 1)
    ]
    params["dpred"] = [
        linear_params(keys[next(ki)], 200, 100),
        linear_params(keys[next(ki)], 100, 50),
        linear_params(keys[next(ki)], 50, 15),
        linear_params(keys[next(ki)], 15, 2),
    ]
    for name in ("logalphas", "means", "logstds"):
        params[name] = [
            linear_params(keys[next(ki)], 200, 100),
            linear_params(keys[next(ki)], 100, num_gauss),
        ]
    return params


# ----------------------------------------------------------------------------
# Host-side packing into tile-aligned slabs
# ----------------------------------------------------------------------------
def pack_params(params, nhidden, num_gauss):
    """Packs all layer weights/biases into 4 lane/sublane-aligned slabs.

    Returns (wt, wf1, wh, bs):
      wt : (16 + 256*(nhidden-1), 256) bf16   input layer + trunk, padded to 256
      wf1: (256, 512)                  bf16   fused head layer 1 (4 x 128-lane blocks)
      wh : (768, 128)                  bf16   fused block-diag head layer 2 (rows 0:512)
                                              + dpred Linear(50,15) (rows 512:640)
                                              + dpred Linear(15,2)  (rows 640:768)
      bs : (round_up(nhidden+4, 8), 512) f32  one padded bias row per fused layer
    """
    G = num_gauss
    assert 64 + 3 * G <= 128, "num_gauss too large for the packed head layout"
    assert nhidden >= 2

    def npa(a):
        return np.asarray(a, np.float32)

    # --- trunk weight slab ---------------------------------------------------
    wt = np.zeros((16 + 256 * (nhidden - 1), 256), np.float32)
    w_in, b_in = params["in"][0]
    wt[0:7, 0:20] = npa(w_in)
    for k, (w, _) in enumerate(params["hidden"]):
        K, N = w.shape
        r0 = 16 + 256 * k
        wt[r0:r0 + K, 0:N] = npa(w)

    # --- fused head layer 1: [dpred0 | logalphas0 | means0 | logstds0] -------
    head1 = [params["dpred"][0], params["logalphas"][0],
             params["means"][0], params["logstds"][0]]
    wf1 = np.zeros((256, 512), np.float32)
    for j, (w, _) in enumerate(head1):
        wf1[0:200, 128 * j:128 * j + 100] = npa(w)

    # --- fused head layer 2 (block diagonal) + dpred tail --------------------
    wh = np.zeros((768, 128), np.float32)
    wh[0:100, 0:50] = npa(params["dpred"][1][0])                 # dpred  100->50 @ lanes 0:50
    for j, name in enumerate(("logalphas", "means", "logstds")):
        wh[128 * (j + 1):128 * (j + 1) + 100,
           64 + G * j:64 + G * (j + 1)] = npa(params[name][1][0])  # 100->G @ lanes 64+G*j
    wh[512:562, 0:15] = npa(params["dpred"][2][0])               # dpred 50->15
    wh[640:655, 0:2] = npa(params["dpred"][3][0])                # dpred 15->2

    # --- bias slab ------------------------------------------------------------
    bs = np.zeros((_round_up(nhidden + 4, 8), 512), np.float32)
    bs[0, 0:20] = npa(b_in).reshape(-1)
    for k, (_, b) in enumerate(params["hidden"]):
        bb = npa(b).reshape(-1)
        bs[k + 1, 0:bb.shape[0]] = bb
    for j, (_, b) in enumerate(head1):
        bs[nhidden, 128 * j:128 * j + 100] = npa(b).reshape(-1)
    bs[nhidden + 1, 0:50] = npa(params["dpred"][1][1]).reshape(-1)
    for j, name in enumerate(("logalphas", "means", "logstds")):
        bs[nhidden + 1, 64 + G * j:64 + G * (j + 1)] = npa(params[name][1][1]).reshape(-1)
    bs[nhidden + 2, 0:15] = npa(params["dpred"][2][1]).reshape(-1)
    bs[nhidden + 3, 0:2] = npa(params["dpred"][3][1]).reshape(-1)

    return (jnp.asarray(wt, jnp.bfloat16), jnp.asarray(wf1, jnp.bfloat16),
            jnp.asarray(wh, jnp.bfloat16), jnp.asarray(bs, jnp.float32))


# ----------------------------------------------------------------------------
# Pallas kernel: entire forward pass fused, one batch tile per grid step
# ----------------------------------------------------------------------------
def mtl_kernel(nhidden, num_gauss, x_ref, wt_ref, wf1_ref, wh_ref, b_ref, out_ref):
    G = num_gauss
    f32 = jnp.float32
    bf16 = jnp.bfloat16

    def mm(a, w):
        # MXU matmul: bf16 operands, f32 accumulation.  `a` is already bf16 for
        # the trunk/head layers (no-op astype); only x / h2-derived values cast.
        return jnp.dot(a.astype(bf16), w, preferred_element_type=f32)

    def lrelu(v):
        # maximum(x, 0.1x) == LeakyReLU(0.1): 2 VALU ops instead of cmp+mul+select.
        return jnp.maximum(v, 0.1 * v)

    x = x_ref[...]                                                        # (TB, 16) f32

    # Input layer: Linear(7,20) + LeakyReLU(0.1), padded 16 -> 256 lanes.
    # Activations are stored as bf16 between layers (halves VMEM streaming);
    # the LeakyReLU itself runs in f32 on the dot result (safe on v5e VPU).
    h = lrelu(mm(x, wt_ref[0:16, :]) + b_ref[0:1, 0:256]).astype(bf16)    # (TB, 256)

    # Hidden trunk: (Linear + LeakyReLU) * (nhidden-1), all padded to 256 lanes.
    for k in range(nhidden - 1):
        r0 = 16 + 256 * k
        h = lrelu(mm(h, wt_ref[r0:r0 + 256, :]) + b_ref[k + 1:k + 2, 0:256]).astype(bf16)

    # Fused head layer 1: [dpred0 | logalphas0 | means0 | logstds0] in 4 x 128-lane blocks.
    h1 = lrelu(mm(h, wf1_ref[...]) + b_ref[nhidden:nhidden + 1, :]).astype(bf16)   # (TB, 512)

    # Fused head layer 2 (block diagonal): dpred hidden2 @ lanes 0:50,
    # logalpha/mu/logsig logits @ lanes 64:64+3G.  No activation on the logits.
    h2 = mm(h1, wh_ref[0:512, :]) + b_ref[nhidden + 1:nhidden + 2, 0:128]  # (TB, 128) f32

    # dpred tail: LReLU -> Linear(50,15) -> LReLU -> Linear(15,2)
    # TODO(synk): Dropout(p=0.01) after dpred's first LeakyReLU is identity (eval mode).
    a2 = lrelu(h2)   # lanes >= 64 carry lrelu'd logits; killed by zero rows of W_d3
    d3 = lrelu(mm(a2, wh_ref[512:640, :]) + b_ref[nhidden + 2:nhidden + 3, 0:128])
    d4 = mm(d3, wh_ref[640:768, :]) + b_ref[nhidden + 3:nhidden + 4, 0:128]  # dpred @ lanes 0:2

    # Gaussian-head epilogue: full-128-lane masked math (no narrow lane slices,
    # no lane relayouts), then ONE dense unmasked 128-lane store.
    lane = jax.lax.broadcasted_iota(jnp.int32, h2.shape, 1)               # (TB, 128)
    la_mask = (lane >= 64) & (lane < 64 + G)
    ls_mask = (lane >= 64 + 2 * G) & (lane < 64 + 3 * G)
    gauss_mask = (lane >= 64) & (lane < 64 + 3 * G)

    # Row-wise log-softmax over the logalpha lanes via masked max / masked exp-sum.
    la_masked = jnp.where(la_mask, h2, -jnp.inf)
    m = jnp.max(la_masked, axis=1, keepdims=True)                         # (TB, 1)
    lse = m + jnp.log(jnp.sum(jnp.exp(la_masked - m), axis=1, keepdims=True))

    # logalpha lanes -> h2 - lse ; logstd lanes -> clamp(h2) ; mu lanes -> h2.
    gauss = jnp.where(la_mask, h2 - lse,
                      jnp.where(ls_mask, jnp.clip(h2, -5.0, 5.0), h2))

    # dpred occupies lanes 0:2 of d4 (zero elsewhere); gauss region at 64:64+3G.
    out_ref[...] = jnp.where(gauss_mask, gauss, d4)


# ----------------------------------------------------------------------------
# Wrapper
# ----------------------------------------------------------------------------
def mtl_forward(x, packed, nhidden, num_gauss, block_b=1024):
    wt, wf1, wh, bs = packed
    G = num_gauss
    B = x.shape[0]

    # Batch tile: as large as possible (amortizes ~0.35us/grid-step overhead and
    # lengthens the MXU M dimension) while keeping >= 2 grid steps whenever the
    # batch allows it, so dimension_semantics=("parallel",) can shard the grid
    # across v7x's two TensorCores.  VMEM footprint is ~3 MB even at TB=1024.
    TB = min(block_b, _round_up(max(B // 2, 8), 8))
    Bp = _round_up(B, TB)
    x_pad = jnp.zeros((Bp, 16), jnp.float32).at[:B, :7].set(x.astype(jnp.float32))

    fn = pl.pallas_call(
        functools.partial(mtl_kernel, nhidden, num_gauss),
        out_shape=jax.ShapeDtypeStruct((Bp, 128), jnp.float32),
        grid_spec=pltpu.PrefetchScalarGridSpec(
            num_scalar_prefetch=0,
            grid=(Bp // TB,),
            in_specs=[
                pl.BlockSpec((TB, 16), lambda i: (i, 0)),     # x, tiled over batch
                pl.BlockSpec(wt.shape, lambda i: (0, 0)),     # trunk weights (VMEM-resident)
                pl.BlockSpec(wf1.shape, lambda i: (0, 0)),    # fused head-1 weights
                pl.BlockSpec(wh.shape, lambda i: (0, 0)),     # fused head-2 + dpred tail
                pl.BlockSpec(bs.shape, lambda i: (0, 0)),     # biases
            ],
            out_specs=pl.BlockSpec((TB, 128), lambda i: (i, 0)),
        ),
        compiler_params=pltpu.CompilerParams(
            dimension_semantics=("parallel",)),   # shards batch grid over v7x's 2 TCs
    )
    out = fn(x_pad, wt, wf1, wh, bs)[:B]

    logalpha = out[:, 64:64 + G]
    mu = out[:, 64 + G:64 + 2 * G]
    logsig = out[:, 64 + 2 * G:64 + 3 * G]
    dpred = out[:, 0:2]
    return logalpha, mu, logsig, dpred


# ----------------------------------------------------------------------------
# Pure-JAX reference (matmul_dtype=bf16 mirrors the kernel's numerics exactly)
# ----------------------------------------------------------------------------
def mtl_reference(x, params, matmul_dtype=jnp.float32):
    def lrelu(v):
        return jnp.where(v > 0, v, 0.1 * v)

    def linear(a, wb):
        w, b = wb
        return jnp.dot(a.astype(matmul_dtype), w.astype(matmul_dtype),
                       preferred_element_type=jnp.float32) + b

    h = x
    for wb in params["in"]:
        h = lrelu(linear(h, wb))
    for wb in params["hidden"]:
        h = lrelu(linear(h, wb))
    trunk = h

    d = trunk
    for i, wb in enumerate(params["dpred"]):
        d = linear(d, wb)
        if i < len(params["dpred"]) - 1:
            d = lrelu(d)

    def head(name):
        wb0, wb1 = params[name]
        return linear(lrelu(linear(trunk, wb0)), wb1)

    logalpha = head("logalphas")
    mu = head("means")
    logsig = jnp.clip(head("logstds"), -5.0, 5.0)
    logalpha = logalpha - jax.scipy.special.logsumexp(logalpha, axis=1, keepdims=True)
    return logalpha, mu, logsig, d


# ----------------------------------------------------------------------------
if __name__ == "__main__":
    nhidden = 4     # hidden sizes: linspace(20, 200, 4) -> [20, 80, 140, 200]
    num_gauss = 3

    key = jax.random.PRNGKey(0)
    kx_small, kp, kx_big = jax.random.split(key, 3)
    params = build_params(kp, nhidden, num_gauss)
    packed = pack_params(params, nhidden, num_gauss)

    for xk, B in ((kx_small, 8), (kx_big, 512)):   # single-tile case + 2-step parallel grid
        x = jax.random.normal(xk, (B, 7), jnp.float32)
        outs = jax.block_until_ready(mtl_forward(x, packed, nhidden, num_gauss))

        # Tight check vs a reference with identical numerics (bf16 matmul operands,
        # f32 accumulation).
        ref_bf16 = mtl_reference(x, params, matmul_dtype=jnp.bfloat16)
        for o, r in zip(outs, ref_bf16):
            np.testing.assert_allclose(np.asarray(o), np.asarray(r), rtol=5e-4, atol=5e-4)

        # Loose check vs the pure-f32 reference (bf16 weights introduce ~1% drift).
        ref_f32 = mtl_reference(x, params, matmul_dtype=jnp.float32)
        for o, r in zip(outs, ref_f32):
            np.testing.assert_allclose(np.asarray(o), np.asarray(r), rtol=1e-1, atol=1e-1)

    print("KERNEL_OK")
</pallas_src>

<mosaic_0001>
module attributes {stable_mosaic.version = 11 : i64} {
  func.func @mtl_kernel(%arg0: i32, %arg1: memref<8x16xf32, #tpu.memory_space<vmem>>, %arg2: memref<784x256xbf16, #tpu.memory_space<vmem>>, %arg3: memref<256x512xbf16, #tpu.memory_space<vmem>>, %arg4: memref<768x128xbf16, #tpu.memory_space<vmem>>, %arg5: memref<8x512xf32, #tpu.memory_space<vmem>>, %arg6: memref<8x128xf32, #tpu.memory_space<vmem>>) attributes {dimension_semantics = [#tpu.dimension_semantics<parallel>], iteration_bounds = array<i64: 1>, scalar_prefetch = 0 : i64, scratch_operands = 0 : i64, tpu.core_type = #tpu.core_type<tc>, window_params = [{transform_indices = @transform_0, window_bounds = array<i64: 8, 16>}, {pipeline_mode = #tpu.pipeline_mode<synchronous>, transform_indices = @transform_1, window_bounds = array<i64: 784, 256>}, {pipeline_mode = #tpu.pipeline_mode<synchronous>, transform_indices = @transform_2, window_bounds = array<i64: 256, 512>}, {pipeline_mode = #tpu.pipeline_mode<synchronous>, transform_indices = @transform_3, window_bounds = array<i64: 768, 128>}, {pipeline_mode = #tpu.pipeline_mode<synchronous>, transform_indices = @transform_4, window_bounds = array<i64: 8, 512>}, {transform_indices = @transform_5, window_bounds = array<i64: 8, 128>}]} {
    %c0 = arith.constant 0 : index
    %c0_0 = arith.constant 0 : index
    %0 = vector.load %arg1[%c0, %c0_0] : memref<8x16xf32, #tpu.memory_space<vmem>>, vector<8x16xf32>
    %c0_1 = arith.constant 0 : index
    %c0_2 = arith.constant 0 : index
    %1 = vector.load %arg2[%c0_1, %c0_2] : memref<784x256xbf16, #tpu.memory_space<vmem>>, vector<16x256xbf16>
    %2 = arith.truncf %0 : vector<8x16xf32> to vector<8x16xbf16>
    %cst = arith.constant dense<0.000000e+00> : vector<8x256xf32>
    %3 = tpu.matmul %2, %1, %cst {dimension_numbers = #tpu.dot_dimension_numbers<[1], [0], [0], [1], [0, 0, 1, 1], [], []>} : vector<8x16xbf16>, vector<16x256xbf16>, vector<8x256xf32> -> vector<8x256xf32>
    %c0_3 = arith.constant 0 : index
    %c0_4 = arith.constant 0 : index
    %4 = vector.load %arg5[%c0_3, %c0_4] : memref<8x512xf32, #tpu.memory_space<vmem>>, vector<1x256xf32>
    %5 = vector.broadcast %4 : vector<1x256xf32> to vector<8x256xf32>
    %6 = arith.addf %3, %5 : vector<8x256xf32>
    %cst_5 = arith.constant 1.000000e-01 : f32
    %7 = vector.broadcast %cst_5 : f32 to vector<8x256xf32>
    %8 = arith.mulf %7, %6 : vector<8x256xf32>
    %9 = arith.maximumf %6, %8 : vector<8x256xf32>
    %10 = arith.truncf %9 : vector<8x256xf32> to vector<8x256xbf16>
    %c16 = arith.constant 16 : index
    %c0_6 = arith.constant 0 : index
    %11 = vector.load %arg2[%c16, %c0_6] : memref<784x256xbf16, #tpu.memory_space<vmem>>, vector<256x256xbf16>
    %cst_7 = arith.constant dense<0.000000e+00> : vector<8x256xf32>
    %12 = tpu.matmul %10, %11, %cst_7 {dimension_numbers = #tpu.dot_dimension_numbers<[1], [0], [0], [1], [0, 0, 1, 1], [], []>} : vector<8x256xbf16>, vector<256x256xbf16>, vector<8x256xf32> -> vector<8x256xf32>
    %c1 = arith.constant 1 : index
    %c0_8 = arith.constant 0 : index
    %13 = vector.load %arg5[%c1, %c0_8] : memref<8x512xf32, #tpu.memory_space<vmem>>, vector<1x256xf32>
    %14 = vector.broadcast %13 : vector<1x256xf32> to vector<8x256xf32>
    %15 = arith.addf %12, %14 : vector<8x256xf32>
    %cst_9 = arith.constant 1.000000e-01 : f32
    %16 = vector.broadcast %cst_9 : f32 to vector<8x256xf32>
    %17 = arith.mulf %16, %15 : vector<8x256xf32>
    %18 = arith.maximumf %15, %17 : vector<8x256xf32>
    %19 = arith.truncf %18 : vector<8x256xf32> to vector<8x256xbf16>
    %c272 = arith.constant 272 : index
    %c0_10 = arith.constant 0 : index
    %20 = vector.load %arg2[%c272, %c0_10] : memref<784x256xbf16, #tpu.memory_space<vmem>>, vector<256x256xbf16>
    %cst_11 = arith.constant dense<0.000000e+00> : vector<8x256xf32>
    %21 = tpu.matmul %19, %20, %cst_11 {dimension_numbers = #tpu.dot_dimension_numbers<[1], [0], [0], [1], [0, 0, 1, 1], [], []>} : vector<8x256xbf16>, vector<256x256xbf16>, vector<8x256xf32> -> vector<8x256xf32>
    %c2 = arith.constant 2 : index
    %c0_12 = arith.constant 0 : index
    %22 = vector.load %arg5[%c2, %c0_12] : memref<8x512xf32, #tpu.memory_space<vmem>>, vector<1x256xf32>
    %23 = vector.broadcast %22 : vector<1x256xf32> to vector<8x256xf32>
    %24 = arith.addf %21, %23 : vector<8x256xf32>
    %cst_13 = arith.constant 1.000000e-01 : f32
    %25 = vector.broadcast %cst_13 : f32 to vector<8x256xf32>
    %26 = arith.mulf %25, %24 : vector<8x256xf32>
    %27 = arith.maximumf %24, %26 : vector<8x256xf32>
    %28 = arith.truncf %27 : vector<8x256xf32> to vector<8x256xbf16>
    %c528 = arith.constant 528 : index
    %c0_14 = arith.constant 0 : index
    %29 = vector.load %arg2[%c528, %c0_14] : memref<784x256xbf16, #tpu.memory_space<vmem>>, vector<256x256xbf16>
    %cst_15 = arith.constant dense<0.000000e+00> : vector<8x256xf32>
    %30 = tpu.matmul %28, %29, %cst_15 {dimension_numbers = #tpu.dot_dimension_numbers<[1], [0], [0], [1], [0, 0, 1, 1], [], []>} : vector<8x256xbf16>, vector<256x256xbf16>, vector<8x256xf32> -> vector<8x256xf32>
    %c3 = arith.constant 3 : index
    %c0_16 = arith.constant 0 : index
    %31 = vector.load %arg5[%c3, %c0_16] : memref<8x512xf32, #tpu.memory_space<vmem>>, vector<1x256xf32>
    %32 = vector.broadcast %31 : vector<1x256xf32> to vector<8x256xf32>
    %33 = arith.addf %30, %32 : vector<8x256xf32>
    %cst_17 = arith.constant 1.000000e-01 : f32
    %34 = vector.broadcast %cst_17 : f32 to vector<8x256xf32>
    %35 = arith.mulf %34, %33 : vector<8x256xf32>
    %36 = arith.maximumf %33, %35 : vector<8x256xf32>
    %37 = arith.truncf %36 : vector<8x256xf32> to vector<8x256xbf16>
    %c0_18 = arith.constant 0 : index
    %c0_19 = arith.constant 0 : index
    %38 = vector.load %arg3[%c0_18, %c0_19] : memref<256x512xbf16, #tpu.memory_space<vmem>>, vector<256x512xbf16>
    %cst_20 = arith.constant dense<0.000000e+00> : vector<8x512xf32>
    %39 = tpu.matmul %37, %38, %cst_20 {dimension_numbers = #tpu.dot_dimension_numbers<[1], [0], [0], [1], [0, 0, 1, 1], [], []>} : vector<8x256xbf16>, vector<256x512xbf16>, vector<8x512xf32> -> vector<8x512xf32>
    %c4 = arith.constant 4 : index
    %c0_21 = arith.constant 0 : index
    %40 = vector.load %arg5[%c4, %c0_21] : memref<8x512xf32, #tpu.memory_space<vmem>>, vector<1x512xf32>
    %41 = vector.broadcast %40 : vector<1x512xf32> to vector<8x512xf32>
    %42 = arith.addf %39, %41 : vector<8x512xf32>
    %cst_22 = arith.constant 1.000000e-01 : f32
    %43 = vector.broadcast %cst_22 : f32 to vector<8x512xf32>
    %44 = arith.mulf %43, %42 : vector<8x512xf32>
    %45 = arith.maximumf %42, %44 : vector<8x512xf32>
    %46 = arith.truncf %45 : vector<8x512xf32> to vector<8x512xbf16>
    %c0_23 = arith.constant 0 : index
    %c0_24 = arith.constant 0 : index
    %47 = vector.load %arg4[%c0_23, %c0_24] : memref<768x128xbf16, #tpu.memory_space<vmem>>, vector<512x128xbf16>
    %cst_25 = arith.constant dense<0.000000e+00> : vector<8x128xf32>
    %48 = tpu.matmul %46, %47, %cst_25 {dimension_numbers = #tpu.dot_dimension_numbers<[1], [0], [0], [1], [0, 0, 1, 1], [], []>} : vector<8x512xbf16>, vector<512x128xbf16>, vector<8x128xf32> -> vector<8x128xf32>
    %c5 = arith.constant 5 : index
    %c0_26 = arith.constant 0 : index
    %49 = vector.load %arg5[%c5, %c0_26] : memref<8x512xf32, #tpu.memory_space<vmem>>, vector<1x128xf32>
    %50 = vector.broadcast %49 : vector<1x128xf32> to vector<8x128xf32>
    %51 = arith.addf %48, %50 : vector<8x128xf32>
    %cst_27 = arith.constant 1.000000e-01 : f32
    %52 = vector.broadcast %cst_27 : f32 to vector<8x128xf32>
    %53 = arith.mulf %52, %51 : vector<8x128xf32>
    %54 = arith.maximumf %51, %53 : vector<8x128xf32>
    %c512 = arith.constant 512 : index
    %c0_28 = arith.constant 0 : index
    %55 = vector.load %arg4[%c512, %c0_28] : memref<768x128xbf16, #tpu.memory_space<vmem>>, vector<128x128xbf16>
    %56 = arith.truncf %54 : vector<8x128xf32> to vector<8x128xbf16>
    %cst_29 = arith.constant dense<0.000000e+00> : vector<8x128xf32>
    %57 = tpu.matmul %56, %55, %cst_29 {dimension_numbers = #tpu.dot_dimension_numbers<[1], [0], [0], [1], [0, 0, 1, 1], [], []>} : vector<8x128xbf16>, vector<128x128xbf16>, vector<8x128xf32> -> vector<8x128xf32>
    %c6 = arith.constant 6 : index
    %c0_30 = arith.constant 0 : index
    %58 = vector.load %arg5[%c6, %c0_30] : memref<8x512xf32, #tpu.memory_space<vmem>>, vector<1x128xf32>
    %59 = vector.broadcast %58 : vector<1x128xf32> to vector<8x128xf32>
    %60 = arith.addf %57, %59 : vector<8x128xf32>
    %cst_31 = arith.constant 1.000000e-01 : f32
    %61 = vector.broadcast %cst_31 : f32 to vector<8x128xf32>
    %62 = arith.mulf %61, %60 : vector<8x128xf32>
    %63 = arith.maximumf %60, %62 : vector<8x128xf32>
    %c640 = arith.constant 640 : index
    %c0_32 = arith.constant 0 : index
    %64 = vector.load %arg4[%c640, %c0_32] : memref<768x128xbf16, #tpu.memory_space<vmem>>, vector<128x128xbf16>
    %65 = arith.truncf %63 : vector<8x128xf32> to vector<8x128xbf16>
    %cst_33 = arith.constant dense<0.000000e+00> : vector<8x128xf32>
    %66 = tpu.matmul %65, %64, %cst_33 {dimension_numbers = #tpu.dot_dimension_numbers<[1], [0], [0], [1], [0, 0, 1, 1], [], []>} : vector<8x128xbf16>, vector<128x128xbf16>, vector<8x128xf32> -> vector<8x128xf32>
    %c7 = arith.constant 7 : index
    %c0_34 = arith.constant 0 : index
    %67 = vector.load %arg5[%c7, %c0_34] : memref<8x512xf32, #tpu.memory_space<vmem>>, vector<1x128xf32>
    %68 = vector.broadcast %67 : vector<1x128xf32> to vector<8x128xf32>
    %69 = arith.addf %66, %68 : vector<8x128xf32>
    %70 = tpu.iota {dimensions = array<i32: 1>} : vector<8x128xi32>
    %c64_i32 = arith.constant 64 : i32
    %71 = vector.broadcast %c64_i32 : i32 to vector<8x128xi32>
    %72 = arith.cmpi sge, %70, %71 : vector<8x128xi32>
    %c67_i32 = arith.constant 67 : i32
    %73 = vector.broadcast %c67_i32 : i32 to vector<8x128xi32>
    %74 = arith.cmpi slt, %70, %73 : vector<8x128xi32>
    %75 = arith.andi %72, %74 : vector<8x128xi1>
    %c70_i32 = arith.constant 70 : i32
    %76 = vector.broadcast %c70_i32 : i32 to vector<8x128xi32>
    %77 = arith.cmpi sge, %70, %76 : vector<8x128xi32>
    %c73_i32 = arith.constant 73 : i32
    %78 = vector.broadcast %c73_i32 : i32 to vector<8x128xi32>
    %79 = arith.cmpi slt, %70, %78 : vector<8x128xi32>
    %80 = arith.andi %77, %79 : vector<8x128xi1>
    %c64_i32_35 = arith.constant 64 : i32
    %81 = vector.broadcast %c64_i32_35 : i32 to vector<8x128xi32>
    %82 = arith.cmpi sge, %70, %81 : vector<8x128xi32>
    %c73_i32_36 = arith.constant 73 : i32
    %83 = vector.broadcast %c73_i32_36 : i32 to vector<8x128xi32>
    %84 = arith.cmpi slt, %70, %83 : vector<8x128xi32>
    %85 = arith.andi %82, %84 : vector<8x128xi1>
    %cst_37 = arith.constant 0xFF800000 : f32
    %86 = vector.broadcast %cst_37 : f32 to vector<8x128xf32>
    %87 = arith.select %75, %51, %86 : vector<8x128xi1>, vector<8x128xf32>
    %cst_38 = arith.constant dense<0xFF800000> : vector<8xf32>
    %88 = vector.multi_reduction <maximumf>, %87, %cst_38 [1] : vector<8x128xf32> to vector<8xf32>
    %89 = vector.shape_cast %88 : vector<8xf32> to vector<8x1xf32>
    %90 = vector.broadcast %89 : vector<8x1xf32> to vector<8x128xf32>
    %91 = arith.subf %87, %90 : vector<8x128xf32>
    %92 = math.exp %91 : vector<8x128xf32>
    %cst_39 = arith.constant dense<0.000000e+00> : vector<8xf32>
    %93 = vector.multi_reduction <add>, %92, %cst_39 [1] : vector<8x128xf32> to vector<8xf32>
    %94 = vector.shape_cast %93 : vector<8xf32> to vector<8x1xf32>
    %95 = math.log %94 : vector<8x1xf32>
    %96 = arith.addf %89, %95 : vector<8x1xf32>
    %97 = vector.broadcast %96 : vector<8x1xf32> to vector<8x128xf32>
    %98 = arith.subf %51, %97 : vector<8x128xf32>
    %cst_40 = arith.constant -5.000000e+00 : f32
    %cst_41 = arith.constant 5.000000e+00 : f32
    %99 = vector.broadcast %cst_40 : f32 to vector<8x128xf32>
    %100 = arith.maximumf %99, %51 : vector<8x128xf32>
    %101 = vector.broadcast %cst_41 : f32 to vector<8x128xf32>
    %102 = arith.minimumf %101, %100 : vector<8x128xf32>
    %103 = arith.select %80, %102, %51 : vector<8x128xi1>, vector<8x128xf32>
    %104 = arith.select %75, %98, %103 : vector<8x128xi1>, vector<8x128xf32>
    %105 = arith.select %85, %104, %69 : vector<8x128xi1>, vector<8x128xf32>
    %c0_42 = arith.constant 0 : index
    %c0_43 = arith.constant 0 : index
    %106 = vector.load %arg6[%c0_42, %c0_43] : memref<8x128xf32, #tpu.memory_space<vmem>>, vector<8x128xf32>
    tpu.vector_store %arg6[%c0_42, %c0_43], %105 {strides = array<i32>} : memref<8x128xf32, #tpu.memory_space<vmem>>, vector<8x128xf32>,
    return
  }
  func.func @transform_0(%arg0: i32) -> (i32, i32) {
    %c0_i32 = arith.constant 0 : i32
    %c0_i32_0 = arith.constant 0 : i32
    return %arg0, %c0_i32 : i32, i32
  }
  func.func @transform_1(%arg0: i32) -> (i32, i32) {
    %c0_i32 = arith.constant 0 : i32
    %c0_i32_0 = arith.constant 0 : i32
    %c0_i32_1 = arith.constant 0 : i32
    return %c0_i32, %c0_i32_0 : i32, i32
  }
  func.func @transform_2(%arg0: i32) -> (i32, i32) {
    %c0_i32 = arith.constant 0 : i32
    %c0_i32_0 = arith.constant 0 : i32
    %c0_i32_1 = arith.constant 0 : i32
    return %c0_i32, %c0_i32_0 : i32, i32
  }
  func.func @transform_3(%arg0: i32) -> (i32, i32) {
    %c0_i32 = arith.constant 0 : i32
    %c0_i32_0 = arith.constant 0 : i32
    %c0_i32_1 = arith.constant 0 : i32
    return %c0_i32, %c0_i32_0 : i32, i32
  }
  func.func @transform_4(%arg0: i32) -> (i32, i32) {
    %c0_i32 = arith.constant 0 : i32
    %c0_i32_0 = arith.constant 0 : i32
    %c0_i32_1 = arith.constant 0 : i32
    return %c0_i32, %c0_i32_0 : i32, i32
  }
  func.func @transform_5(%arg0: i32) -> (i32, i32) {
    %c0_i32 = arith.constant 0 : i32
    %c0_i32_0 = arith.constant 0 : i32
    return %arg0, %c0_i32 : i32, i32
  }
}

</mosaic_0001>

<llo_original>
// kernel: tpu_custom_call.1
$region0: #{tpu_custom_call.1}
  #allocation0 [shape = 'u32[]', space=smem, size = 0x4, offset = 0x4, fixed_abs, tag = 'smem constant byte address 0x4 - core index']
  #allocation1 [shape = 'u32[144,128]{1,0:T(1,128)}', space=vmem, size = 0x12000, scoped, tag = 'internal scratch']
  %s0 = inlined_call_operand.hbm [shape: f32[8,16], index: 0, kind: input, shape index: {}]
  %s1 = inlined_call_operand.hbm [shape: bf16[784,256], index: 1, kind: input, shape index: {}]
  %s2 = inlined_call_operand.hbm [shape: bf16[256,512], index: 2, kind: input, shape index: {}]
  %s3 = inlined_call_operand.hbm [shape: bf16[768,128], index: 3, kind: input, shape index: {}]
  %s4 = inlined_call_operand.hbm [shape: f32[8,512], index: 4, kind: input, shape index: {}]
  %s5 = inlined_call_operand.hbm [shape: f32[8,128], index: 5, kind: output, shape index: {}]
  %s6 = sld [smem:[#allocation0]]
  $region50: #{tpu_custom_call.1} parent=0
    _
  %s8 = ssub.s32 1, %s6
  %s9 = scalar_select 0, %s8, %s6
  $region1: #{tpu_custom_call.1} parent=0
    #allocation2 [shape = 'u8[4096]{0}', space=vmem, size = 0x1000, scoped, tag = 'input window, operand 0, single buffered']
    #allocation3 [shape = 's32[1]{0}', space=sflag, size = 0x4, scoped, tag = 'scoped memory for tpu_custom_call.1']
    #allocation4 [shape = 's32[1]{0}', space=sflag, size = 0x4, scoped, tag = 'scoped memory for tpu_custom_call.1']
    #allocation5 [shape = 'u8[401408]{0}', space=vmem, size = 0x62000, scoped, tag = 'input window, operand 1, single buffered']
    #allocation6 [shape = 's32[1]{0}', space=sflag, size = 0x4, scoped, tag = 'scoped memory for tpu_custom_call.1']
    #allocation7 [shape = 'u8[262144]{0}', space=vmem, size = 0x40000, scoped, tag = 'input window, operand 2, single buffered']
    #allocation8 [shape = 'u8[196608]{0}', space=vmem, size = 0x30000, scoped, tag = 'input window, operand 3, single buffered']
    #allocation9 [shape = 's32[1]{0}', space=sflag, size = 0x4, scoped, tag = 'scoped memory for tpu_custom_call.1']
    #allocation10 [shape = 'u8[16384]{0}', space=vmem, size = 0x4000, scoped, tag = 'input window, operand 4, single buffered']
    #allocation11 [shape = 'u8[4096]{0}', space=vmem, size = 0x1000, scoped, tag = 'output window, operand 0, single buffered']
    %10 = vsyncpa [#allocation3], 0
    %11 = vsyncpa [#allocation6], 0
    %12 = vsyncpa [#allocation9], 0
    %13 = vsyncpa [#allocation4], 0
    // Predicated region
    $region2: #{tpu_custom_call.1} parent=1 // pred_check
      _
    $region3: #{tpu_custom_call.1} parent=1 // pred_check_branch
      %15 = sbr.rel (0) target = $region5
    $region4: #{tpu_custom_call.1} parent=1 // pred_region
      %s17 = ssub.s32 128, 128
      %18 = vsyncadd [#allocation3], %s17
      %s20 = sshll.u32 [#allocation2], 4
      %s21 = int_to_ptr.vmem [resolvable:$true] %s20
      %23 = dma.hbm_to_vmem [thread:$0]  %s0, 128, %s21, [#allocation3]
    $region5: #{tpu_custom_call.1} parent=1 // pred_fallthru
      _
    // Predicated region
    $region6: #{tpu_custom_call.1} parent=1 // pred_check
      _
    $region7: #{tpu_custom_call.1} parent=1 // pred_check_branch
      %25 = sbr.rel (0) target = $region9
    $region8: #{tpu_custom_call.1} parent=1 // pred_region
      %s27 = ssub.s32 12544, 12544
      %28 = vsyncadd [#allocation6], %s27
      %s29 = sshll.u32 [#allocation5], 4
      %s30 = int_to_ptr.vmem [resolvable:$true] %s29
      %35 = dma.hbm_to_vmem [thread:$0]  %s1, 12544, %s30, [#allocation6], 128, 128, 8
    $region9: #{tpu_custom_call.1} parent=1 // pred_fallthru
      _
    // Predicated region
    $region10: #{tpu_custom_call.1} parent=1 // pred_check
      _
    $region11: #{tpu_custom_call.1} parent=1 // pred_check_branch
      %37 = sbr.rel (0) target = $region13
    $region12: #{tpu_custom_call.1} parent=1 // pred_region
      %s39 = ssub.s32 8192, 8192
      %40 = vsyncadd [#allocation6], %s39
      %s41 = sshll.u32 [#allocation7], 4
      %s42 = int_to_ptr.vmem [resolvable:$true] %s41
      %47 = dma.hbm_to_vmem [thread:$0]  %s2, 8192, %s42, [#allocation6], 256, 256, 16
    $region13: #{tpu_custom_call.1} parent=1 // pred_fallthru
      _
    // Predicated region
    $region14: #{tpu_custom_call.1} parent=1 // pred_check
      _
    $region15: #{tpu_custom_call.1} parent=1 // pred_check_branch
      %49 = sbr.rel (0) target = $region17
    $region16: #{tpu_custom_call.1} parent=1 // pred_region
      %s51 = ssub.s32 6144, 6144
      %52 = vsyncadd [#allocation9], %s51
      %s53 = sshll.u32 [#allocation8], 4
      %s54 = int_to_ptr.vmem [resolvable:$true] %s53
      %59 = dma.hbm_to_vmem [thread:$0]  %s3, 6144, %s54, [#allocation9], 64, 64, 4
    $region17: #{tpu_custom_call.1} parent=1 // pred_fallthru
      _
    // Predicated region
    $region18: #{tpu_custom_call.1} parent=1 // pred_check
      _
    $region19: #{tpu_custom_call.1} parent=1 // pred_check_branch
      %61 = sbr.rel (0) target = $region21
    $region20: #{tpu_custom_call.1} parent=1 // pred_region
      %s63 = ssub.s32 512, 512
      %64 = vsyncadd [#allocation9], %s63
      %s66 = sshll.u32 [#allocation10], 4
      %s67 = int_to_ptr.vmem [resolvable:$true] %s66
      %69 = dma.hbm_to_vmem [thread:$0]  %s4, 512, %s67, [#allocation9]
    $region21: #{tpu_custom_call.1} parent=1 // pred_fallthru
      _
    // Predicated region
    $region22: #{tpu_custom_call.1} parent=1 // pred_check
      _
    $region23: #{tpu_custom_call.1} parent=1 // pred_check_branch
      %71 = sbr.rel (0) target = $region25
    $region24: #{tpu_custom_call.1} parent=1 // pred_region
      %72 = dma.done [#allocation3], 128
    $region25: #{tpu_custom_call.1} parent=1 // pred_fallthru
      _
    // Predicated region
    $region26: #{tpu_custom_call.1} parent=1 // pred_check
      _
    $region27: #{tpu_custom_call.1} parent=1 // pred_check_branch
      %74 = sbr.rel (0) target = $region29
    $region28: #{tpu_custom_call.1} parent=1 // pred_region
      %75 = dma.done [#allocation6], 12544
    $region29: #{tpu_custom_call.1} parent=1 // pred_fallthru
      _
    // Predicated region
    $region30: #{tpu_custom_call.1} parent=1 // pred_check
      _
    $region31: #{tpu_custom_call.1} parent=1 // pred_check_branch
      %77 = sbr.rel (0) target = $region33
    $region32: #{tpu_custom_call.1} parent=1 // pred_region
      %78 = dma.done [#allocation6], 8192
    $region33: #{tpu_custom_call.1} parent=1 // pred_fallthru
      _
    // Predicated region
    $region34: #{tpu_custom_call.1} parent=1 // pred_check
      _
    $region35: #{tpu_custom_call.1} parent=1 // pred_check_branch
      %80 = sbr.rel (0) target = $region37
    $region36: #{tpu_custom_call.1} parent=1 // pred_region
      %81 = dma.done [#allocation9], 6144
    $region37: #{tpu_custom_call.1} parent=1 // pred_fallthru
      _
    // Predicated region
    $region38: #{tpu_custom_call.1} parent=1 // pred_check
      _
    $region39: #{tpu_custom_call.1} parent=1 // pred_check_branch
      %83 = sbr.rel (0) target = $region41
    $region40: #{tpu_custom_call.1} parent=1 // pred_region
      %84 = dma.done [#allocation9], 512
    $region41: #{tpu_custom_call.1} parent=1 // pred_fallthru
      _
    %v86 = vld [vmem:[#allocation2] sm:$0xff]
    %v87 = vld [vmem:[#allocation5] sm:$0xff]
    %v88 = vld [vmem:[#allocation5 + $0x8] sm:$0xff]
    %v89 = vpack.c.bf16 %v86, %v86
    %v90 = vld [vmem:[#allocation10] ss:$8 sm:$0x3]
    %v92 = vlaneseq
    %v93 = vshrl.u32 %v92, 7
    %v94 = vsub.s32 0, %v93
    %v95 = vrot.slane %v90, %v94
    %v96 = vlaneseq
    %v97 = vshrl.u32 %v96, 7
    %v98 = vsub.s32 1, %v97
    %v99 = vrot.slane %v90, %v98
    %v104 = vunpack.c.l.b16 %v87
    %v105 = vunpack.c.h.b16 %v87
    %v106 = vunpack.c.l.b16 %v88
    %v107 = vunpack.c.h.b16 %v88
    %v108 = vpack.c.b16 %v106, %v104
    %v109 = vpack.c.b16 %v107, %v105
    %vm112 = vcmask 130048
    %v114 = vsel %vm112, %v89, 0
    %116 = vmatprep.subr.bf16.mxu0 %v109
    %117 = vmatpush1.bf16.msra.mxu0 %v108
    %118 = vmatprep.subr.bf16.mxu0 0
    %119 = vmatpush1.bf16.msra.mxu0 0
    %120 = vmatprep.subr.bf16.mxu0 0
    %121 = vmatpush1.bf16.msra.mxu0 0
    %122 = vmatprep.subr.bf16.mxu0 0
    %123 = vmatpush1.bf16.msra.mxu0 0
    %124 = vmatprep.subr.bf16.mxu0 0
    %125 = vmatpush1.bf16.msra.mxu0 0
    %126 = vmatprep.subr.bf16.mxu0 0
    %127 = vmatpush1.bf16.msra.mxu0 0
    %128 = vmatprep.subr.bf16.mxu0 0
    %129 = vmatpush1.bf16.msra.mxu0 0
    %130 = vmatprep.subr.bf16.mxu0 0
    %131 = vmatpush1.bf16.msra.mxu0 0
    %132 = vmatprep.subr.bf16.mxu0 0
    %133 = vmatpush1.bf16.msra.mxu0 0
    %134 = vmatprep.subr.bf16.mxu0 0
    %135 = vmatpush1.bf16.msra.mxu0 0
    %136 = vmatprep.subr.bf16.mxu0 0
    %137 = vmatpush1.bf16.msra.mxu0 0
    %138 = vmatprep.subr.bf16.mxu0 0
    %139 = vmatpush1.bf16.msra.mxu0 0
    %140 = vmatprep.subr.bf16.mxu0 0
    %141 = vmatpush1.bf16.msra.mxu0 0
    %142 = vmatprep.subr.bf16.mxu0 0
    %143 = vmatpush1.bf16.msra.mxu0 0
    %144 = vmatprep.subr.bf16.mxu0 0
    %145 = vmatpush1.bf16.msra.mxu0 0
    %146 = vmatprep.subr.bf16.mxu0 0
    %147 = vmatpush1.bf16.msra.mxu0 0
    %148 = vmatprep.mubr.bf16.mxu0 0
    %149 = vmatmul.mubr.bf16.gmra.mrb[0].mxu0 %v114
    %v150 = vpop.f32.mrb[0].mxu0
    %v151 = vadd.f32 %v95, %v150
    %v152 = vpop.f32.mrb[0].mxu0
    %v153 = vadd.f32 %v99, %v152
    %v154 = vpop.f32.mrb[0].mxu0
    %v155 = vpop.f32.mrb[0].mxu0
    %156 = vdwg.mxu0
    %v157 = vmul.f32 %v151, 0.1
    %v158 = vmul.f32 %v153, 0.1
    %v159 = vmax.f32 %v151, %v157
    %v160 = vmax.f32 %v153, %v158
    %v161 = vpack.c.bf16 %v159, %v159
    %v162 = vpack.c.bf16 %v160, %v160
    %v163 = vld [vmem:[#allocation5 + $0x10] sm:$0xff]
    %v164 = vld [vmem:[#allocation5 + $0x18] sm:$0xff]
    %v165 = vld [vmem:[#allocation5 + $0x20] sm:$0xff]
    %v166 = vld [vmem:[#allocation5 + $0x28] sm:$0xff]
    %v167 = vld [vmem:[#allocation5 + $0x30] sm:$0xff]
    %v168 = vld [vmem:[#allocation5 + $0x38] sm:$0xff]
    %v169 = vld [vmem:[#allocation5 + $0x40] sm:$0xff]
    %v170 = vld [vmem:[#allocation5 + $0x48] sm:$0xff]
    %v171 = vld [vmem:[#allocation5 + $0x50] sm:$0xff]
    %v172 = vld [vmem:[#allocation5 + $0x58] sm:$0xff]
    %v173 = vld [vmem:[#allocation5 + $0x60] sm:$0xff]
    %v174 = vld [vmem:[#allocation5 + $0x68] sm:$0xff]
    %v175 = vld [vmem:[#allocation5 + $0x70] sm:$0xff]
    %v176 = vld [vmem:[#allocation5 + $0x78] sm:$0xff]
    %v177 = vld [vmem:[#allocation5 + $0x80] sm:$0xff]
    %v178 = vld [vmem:[#allocation5 + $0x88] sm:$0xff]
    %v179 = vld [vmem:[#allocation5 + $0x90] sm:$0xff]
    %v180 = vld [vmem:[#allocation5 + $0x98] sm:$0xff]
    %v181 = vld [vmem:[#allocation5 + $0xa0] sm:$0xff]
    %v182 = vld [vmem:[#allocation5 + $0xa8] sm:$0xff]
    %v183 = vld [vmem:[#allocation5 + $0xb0] sm:$0xff]
    %v184 = vld [vmem:[#allocation5 + $0xb8] sm:$0xff]
    %v185 = vld [vmem:[#allocation5 + $0xc0] sm:$0xff]
    %v186 = vld [vmem:[#allocation5 + $0xc8] sm:$0xff]
    %v187 = vld [vmem:[#allocation5 + $0xd0] sm:$0xff]
    %v188 = vld [vmem:[#allocation5 + $0xd8] sm:$0xff]
    %v189 = vld [vmem:[#allocation5 + $0xe0] sm:$0xff]
    %v190 = vld [vmem:[#allocation5 + $0xe8] sm:$0xff]
    %v191 = vld [vmem:[#allocation5 + $0xf0] sm:$0xff]
    %v192 = vld [vmem:[#allocation5 + $0xf8] sm:$0xff]
    %v193 = vld [vmem:[#allocation5 + $0x100] sm:$0xff]
    %v194 = vld [vmem:[#allocation5 + $0x108] sm:$0xff]
    %s195 = scalar_lea.vmem [#allocation10], 1
    %v196 = vld [vmem:[%s195] ss:$8 sm:$0x3]
    %v198 = vlaneseq
    %v199 = vshrl.u32 %v198, 7
    %v200 = vsub.s32 0, %v199
    %v201 = vrot.slane %v196, %v200
    %v202 = vlaneseq
    %v203 = vshrl.u32 %v202, 7
    %v204 = vsub.s32 1, %v203
    %v205 = vrot.slane %v196, %v204
    %v240 = vunpack.c.l.b16 %v163
    %v241 = vunpack.c.h.b16 %v163
    %v242 = vunpack.c.l.b16 %v164
    %v243 = vunpack.c.h.b16 %v164
    %v244 = vunpack.c.l.b16 %v165
    %v245 = vunpack.c.h.b16 %v165
    %v246 = vunpack.c.l.b16 %v166
    %v247 = vunpack.c.h.b16 %v166
    %v248 = vunpack.c.l.b16 %v167
    %v249 = vunpack.c.h.b16 %v167
    %v250 = vunpack.c.l.b16 %v168
    %v251 = vunpack.c.h.b16 %v168
    %v252 = vunpack.c.l.b16 %v169
    %v253 = vunpack.c.h.b16 %v169
    %v254 = vunpack.c.l.b16 %v170
    %v255 = vunpack.c.h.b16 %v170
    %v256 = vunpack.c.l.b16 %v171
    %v257 = vunpack.c.h.b16 %v171
    %v258 = vunpack.c.l.b16 %v172
    %v259 = vunpack.c.h.b16 %v172
    %v260 = vunpack.c.l.b16 %v173
    %v261 = vunpack.c.h.b16 %v173
    %v262 = vunpack.c.l.b16 %v174
    %v263 = vunpack.c.h.b16 %v174
    %v264 = vunpack.c.l.b16 %v175
    %v265 = vunpack.c.h.b16 %v175
    %v266 = vunpack.c.l.b16 %v176
    %v267 = vunpack.c.h.b16 %v176
    %v268 = vunpack.c.l.b16 %v177
    %v269 = vunpack.c.h.b16 %v177
    %v270 = vunpack.c.l.b16 %v178
    %v271 = vunpack.c.h.b16 %v178
    %v272 = vunpack.c.l.b16 %v179
    %v273 = vunpack.c.h.b16 %v179
    %v274 = vunpack.c.l.b16 %v180
    %v275 = vunpack.c.h.b16 %v180
    %v276 = vunpack.c.l.b16 %v181
    %v277 = vunpack.c.h.b16 %v181
    %v278 = vunpack.c.l.b16 %v182
    %v279 = vunpack.c.h.b16 %v182
    %v280 = vunpack.c.l.b16 %v183
    %v281 = vunpack.c.h.b16 %v183
    %v282 = vunpack.c.l.b16 %v184
    %v283 = vunpack.c.h.b16 %v184
    %v284 = vunpack.c.l.b16 %v185
    %v285 = vunpack.c.h.b16 %v185
    %v286 = vunpack.c.l.b16 %v186
    %v287 = vunpack.c.h.b16 %v186
    %v288 = vunpack.c.l.b16 %v187
    %v289 = vunpack.c.h.b16 %v187
    %v290 = vunpack.c.l.b16 %v188
    %v291 = vunpack.c.h.b16 %v188
    %v292 = vunpack.c.l.b16 %v189
    %v293 = vunpack.c.h.b16 %v189
    %v294 = vunpack.c.l.b16 %v190
    %v295 = vunpack.c.h.b16 %v190
    %v296 = vunpack.c.l.b16 %v191
    %v297 = vunpack.c.h.b16 %v191
    %v298 = vunpack.c.l.b16 %v192
    %v299 = vunpack.c.h.b16 %v192
    %v300 = vunpack.c.l.b16 %v193
    %v301 = vunpack.c.h.b16 %v193
    %v302 = vunpack.c.l.b16 %v194
    %v303 = vunpack.c.h.b16 %v194
    %v304 = vpack.c.b16 %v242, %v240
    %v305 = vpack.c.b16 %v243, %v241
    %v306 = vpack.c.b16 %v246, %v244
    %v307 = vpack.c.b16 %v247, %v245
    %v308 = vpack.c.b16 %v250, %v248
    %v309 = vpack.c.b16 %v251, %v249
    %v310 = vpack.c.b16 %v254, %v252
    %v311 = vpack.c.b16 %v255, %v253
    %v312 = vpack.c.b16 %v258, %v256
    %v313 = vpack.c.b16 %v259, %v257
    %v314 = vpack.c.b16 %v262, %v260
    %v315 = vpack.c.b16 %v263, %v261
    %v316 = vpack.c.b16 %v266, %v264
    %v317 = vpack.c.b16 %v267, %v265
    %v318 = vpack.c.b16 %v270, %v268
    %v319 = vpack.c.b16 %v271, %v269
    %v320 = vpack.c.b16 %v274, %v272
    %v321 = vpack.c.b16 %v275, %v273
    %v322 = vpack.c.b16 %v278, %v276
    %v323 = vpack.c.b16 %v279, %v277
    %v324 = vpack.c.b16 %v282, %v280
    %v325 = vpack.c.b16 %v283, %v281
    %v326 = vpack.c.b16 %v286, %v284
    %v327 = vpack.c.b16 %v287, %v285
    %v328 = vpack.c.b16 %v290, %v288
    %v329 = vpack.c.b16 %v291, %v289
    %v330 = vpack.c.b16 %v294, %v292
    %v331 = vpack.c.b16 %v295, %v293
    %v332 = vpack.c.b16 %v298, %v296
    %v333 = vpack.c.b16 %v299, %v297
    %v334 = vpack.c.b16 %v302, %v300
    %v335 = vpack.c.b16 %v303, %v301
    %368 = vmatprep.subr.bf16.mxu0 %v305
    %369 = vmatpush1.bf16.msra.mxu0 %v304
    %370 = vmatprep.subr.bf16.mxu0 %v307
    %371 = vmatpush1.bf16.msra.mxu0 %v306
    %372 = vmatprep.subr.bf16.mxu0 %v309
    %373 = vmatpush1.bf16.msra.mxu0 %v308
    %374 = vmatprep.subr.bf16.mxu0 %v311
    %375 = vmatpush1.bf16.msra.mxu0 %v310
    %376 = vmatprep.subr.bf16.mxu0 %v313
    %377 = vmatpush1.bf16.msra.mxu0 %v312
    %378 = vmatprep.subr.bf16.mxu0 %v315
    %379 = vmatpush1.bf16.msra.mxu0 %v314
    %380 = vmatprep.subr.bf16.mxu0 %v317
    %381 = vmatpush1.bf16.msra.mxu0 %v316
    %382 = vmatprep.subr.bf16.mxu0 %v319
    %383 = vmatpush1.bf16.msra.mxu0 %v318
    %384 = vmatprep.subr.bf16.mxu0 %v321
    %385 = vmatpush1.bf16.msra.mxu0 %v320
    %386 = vmatprep.subr.bf16.mxu0 %v323
    %387 = vmatpush1.bf16.msra.mxu0 %v322
    %388 = vmatprep.subr.bf16.mxu0 %v325
    %389 = vmatpush1.bf16.msra.mxu0 %v324
    %390 = vmatprep.subr.bf16.mxu0 %v327
    %391 = vmatpush1.bf16.msra.mxu0 %v326
    %392 = vmatprep.subr.bf16.mxu0 %v329
    %393 = vmatpush1.bf16.msra.mxu0 %v328
    %394 = vmatprep.subr.bf16.mxu0 %v331
    %395 = vmatpush1.bf16.msra.mxu0 %v330
    %396 = vmatprep.subr.bf16.mxu0 %v333
    %397 = vmatpush1.bf16.msra.mxu0 %v332
    %398 = vmatprep.subr.bf16.mxu0 %v335
    %399 = vmatpush1.bf16.msra.mxu0 %v334
    %400 = vmatprep.mubr.bf16.mxu0 %v162
    %401 = vmatmul.mubr.bf16.gmra.mrb[0].mxu0 %v161
    %v402 = vpop.f32.mrb[0].mxu0
    %v403 = vadd.f32 %v201, %v402
    %v404 = vpop.f32.mrb[0].mxu0
    %v405 = vadd.f32 %v205, %v404
    %v406 = vpop.f32.mrb[0].mxu0
    %v407 = vpop.f32.mrb[0].mxu0
    %408 = vdwg.mxu0
    %v409 = vmul.f32 %v403, 0.1
    %v410 = vmul.f32 %v405, 0.1
    %v411 = vmax.f32 %v403, %v409
    %v412 = vmax.f32 %v405, %v410
    %v413 = vpack.c.bf16 %v411, %v411
    %v414 = vpack.c.bf16 %v412, %v412
    %v415 = vld [vmem:[#allocation5 + $0x110] sm:$0xff]
    %v416 = vld [vmem:[#allocation5 + $0x118] sm:$0xff]
    %v417 = vld [vmem:[#allocation5 + $0x120] sm:$0xff]
    %v418 = vld [vmem:[#allocation5 + $0x128] sm:$0xff]
    %v419 = vld [vmem:[#allocation5 + $0x130] sm:$0xff]
    %v420 = vld [vmem:[#allocation5 + $0x138] sm:$0xff]
    %v421 = vld [vmem:[#allocation5 + $0x140] sm:$0xff]
    %v422 = vld [vmem:[#allocation5 + $0x148] sm:$0xff]
    %v423 = vld [vmem:[#allocation5 + $0x150] sm:$0xff]
    %v424 = vld [vmem:[#allocation5 + $0x158] sm:$0xff]
    %v425 = vld [vmem:[#allocation5 + $0x160] sm:$0xff]
    %v426 = vld [vmem:[#allocation5 + $0x168] sm:$0xff]
    %v427 = vld [vmem:[#allocation5 + $0x170] sm:$0xff]
    %v428 = vld [vmem:[#allocation5 + $0x178] sm:$0xff]
    %v429 = vld [vmem:[#allocation5 + $0x180] sm:$0xff]
    %v430 = vld [vmem:[#allocation5 + $0x188] sm:$0xff]
    %v431 = vld [vmem:[#allocation5 + $0x190] sm:$0xff]
    %v432 = vld [vmem:[#allocation5 + $0x198] sm:$0xff]
    %v433 = vld [vmem:[#allocation5 + $0x1a0] sm:$0xff]
    %v434 = vld [vmem:[#allocation5 + $0x1a8] sm:$0xff]
    %v435 = vld [vmem:[#allocation5 + $0x1b0] sm:$0xff]
    %v436 = vld [vmem:[#allocation5 + $0x1b8] sm:$0xff]
    %v437 = vld [vmem:[#allocation5 + $0x1c0] sm:$0xff]
    %v438 = vld [vmem:[#allocation5 + $0x1c8] sm:$0xff]
    %v439 = vld [vmem:[#allocation5 + $0x1d0] sm:$0xff]
    %v440 = vld [vmem:[#allocation5 + $0x1d8] sm:$0xff]
    %v441 = vld [vmem:[#allocation5 + $0x1e0] sm:$0xff]
    %v442 = vld [vmem:[#allocation5 + $0x1e8] sm:$0xff]
    %v443 = vld [vmem:[#allocation5 + $0x1f0] sm:$0xff]
    %v444 = vld [vmem:[#allocation5 + $0x1f8] sm:$0xff]
    %v445 = vld [vmem:[#allocation5 + $0x200] sm:$0xff]
    %v446 = vld [vmem:[#allocation5 + $0x208] sm:$0xff]
    %s447 = scalar_lea.vmem [#allocation10], 2
    %v448 = vld [vmem:[%s447] ss:$8 sm:$0x3]
    %v450 = vlaneseq
    %v451 = vshrl.u32 %v450, 7
    %v452 = vsub.s32 0, %v451
    %v453 = vrot.slane %v448, %v452
    %v454 = vlaneseq
    %v455 = vshrl.u32 %v454, 7
    %v456 = vsub.s32 1, %v455
    %v457 = vrot.slane %v448, %v456
    %v492 = vunpack.c.l.b16 %v415
    %v493 = vunpack.c.h.b16 %v415
    %v494 = vunpack.c.l.b16 %v416
    %v495 = vunpack.c.h.b16 %v416
    %v496 = vunpack.c.l.b16 %v417
    %v497 = vunpack.c.h.b16 %v417
    %v498 = vunpack.c.l.b16 %v418
    %v499 = vunpack.c.h.b16 %v418
    %v500 = vunpack.c.l.b16 %v419
    %v501 = vunpack.c.h.b16 %v419
    %v502 = vunpack.c.l.b16 %v420
    %v503 = vunpack.c.h.b16 %v420
    %v504 = vunpack.c.l.b16 %v421
    %v505 = vunpack.c.h.b16 %v421
    %v506 = vunpack.c.l.b16 %v422
    %v507 = vunpack.c.h.b16 %v422
    %v508 = vunpack.c.l.b16 %v423
    %v509 = vunpack.c.h.b16 %v423
    %v510 = vunpack.c.l.b16 %v424
    %v511 = vunpack.c.h.b16 %v424
    %v512 = vunpack.c.l.b16 %v425
    %v513 = vunpack.c.h.b16 %v425
    %v514 = vunpack.c.l.b16 %v426
    %v515 = vunpack.c.h.b16 %v426
    %v516 = vunpack.c.l.b16 %v427
    %v517 = vunpack.c.h.b16 %v427
    %v518 = vunpack.c.l.b16 %v428
    %v519 = vunpack.c.h.b16 %v428
    %v520 = vunpack.c.l.b16 %v429
    %v521 = vunpack.c.h.b16 %v429
    %v522 = vunpack.c.l.b16 %v430
    %v523 = vunpack.c.h.b16 %v430
    %v524 = vunpack.c.l.b16 %v431
    %v525 = vunpack.c.h.b16 %v431
    %v526 = vunpack.c.l.b16 %v432
    %v527 = vunpack.c.h.b16 %v432
    %v528 = vunpack.c.l.b16 %v433
    %v529 = vunpack.c.h.b16 %v433
    %v530 = vunpack.c.l.b16 %v434
    %v531 = vunpack.c.h.b16 %v434
    %v532 = vunpack.c.l.b16 %v435
    %v533 = vunpack.c.h.b16 %v435
    %v534 = vunpack.c.l.b16 %v436
    %v535 = vunpack.c.h.b16 %v436
    %v536 = vunpack.c.l.b16 %v437
    %v537 = vunpack.c.h.b16 %v437
    %v538 = vunpack.c.l.b16 %v438
    %v539 = vunpack.c.h.b16 %v438
    %v540 = vunpack.c.l.b16 %v439
    %v541 = vunpack.c.h.b16 %v439
    %v542 = vunpack.c.l.b16 %v440
    %v543 = vunpack.c.h.b16 %v440
    %v544 = vunpack.c.l.b16 %v441
    %v545 = vunpack.c.h.b16 %v441
    %v546 = vunpack.c.l.b16 %v442
    %v547 = vunpack.c.h.b16 %v442
    %v548 = vunpack.c.l.b16 %v443
    %v549 = vunpack.c.h.b16 %v443
    %v550 = vunpack.c.l.b16 %v444
    %v551 = vunpack.c.h.b16 %v444
    %v552 = vunpack.c.l.b16 %v445
    %v553 = vunpack.c.h.b16 %v445
    %v554 = vunpack.c.l.b16 %v446
    %v555 = vunpack.c.h.b16 %v446
    %v556 = vpack.c.b16 %v494, %v492
    %v557 = vpack.c.b16 %v495, %v493
    %v558 = vpack.c.b16 %v498, %v496
    %v559 = vpack.c.b16 %v499, %v497
    %v560 = vpack.c.b16 %v502, %v500
    %v561 = vpack.c.b16 %v503, %v501
    %v562 = vpack.c.b16 %v506, %v504
    %v563 = vpack.c.b16 %v507, %v505
    %v564 = vpack.c.b16 %v510, %v508
    %v565 = vpack.c.b16 %v511, %v509
    %v566 = vpack.c.b16 %v514, %v512
    %v567 = vpack.c.b16 %v515, %v513
    %v568 = vpack.c.b16 %v518, %v516
    %v569 = vpack.c.b16 %v519, %v517
    %v570 = vpack.c.b16 %v522, %v520
    %v571 = vpack.c.b16 %v523, %v521
    %v572 = vpack.c.b16 %v526, %v524
    %v573 = vpack.c.b16 %v527, %v525
    %v574 = vpack.c.b16 %v530, %v528
    %v575 = vpack.c.b16 %v531, %v529
    %v576 = vpack.c.b16 %v534, %v532
    %v577 = vpack.c.b16 %v535, %v533
    %v578 = vpack.c.b16 %v538, %v536
    %v579 = vpack.c.b16 %v539, %v537
    %v580 = vpack.c.b16 %v542, %v540
    %v581 = vpack.c.b16 %v543, %v541
    %v582 = vpack.c.b16 %v546, %v544
    %v583 = vpack.c.b16 %v547, %v545
    %v584 = vpack.c.b16 %v550, %v548
    %v585 = vpack.c.b16 %v551, %v549
    %v586 = vpack.c.b16 %v554, %v552
    %v587 = vpack.c.b16 %v555, %v553
    %620 = vmatprep.subr.bf16.mxu0 %v557
    %621 = vmatpush1.bf16.msra.mxu0 %v556
    %622 = vmatprep.subr.bf16.mxu0 %v559
    %623 = vmatpush1.bf16.msra.mxu0 %v558
    %624 = vmatprep.subr.bf16.mxu0 %v561
    %625 = vmatpush1.bf16.msra.mxu0 %v560
    %626 = vmatprep.subr.bf16.mxu0 %v563
    %627 = vmatpush1.bf16.msra.mxu0 %v562
    %628 = vmatprep.subr.bf16.mxu0 %v565
    %629 = vmatpush1.bf16.msra.mxu0 %v564
    %630 = vmatprep.subr.bf16.mxu0 %v567
    %631 = vmatpush1.bf16.msra.mxu0 %v566
    %632 = vmatprep.subr.bf16.mxu0 %v569
    %633 = vmatpush1.bf16.msra.mxu0 %v568
    %634 = vmatprep.subr.bf16.mxu0 %v571
    %635 = vmatpush1.bf16.msra.mxu0 %v570
    %636 = vmatprep.subr.bf16.mxu0 %v573
    %637 = vmatpush1.bf16.msra.mxu0 %v572
    %638 = vmatprep.subr.bf16.mxu0 %v575
    %639 = vmatpush1.bf16.msra.mxu0 %v574
    %640 = vmatprep.subr.bf16.mxu0 %v577
    %641 = vmatpush1.bf16.msra.mxu0 %v576
    %642 = vmatprep.subr.bf16.mxu0 %v579
    %643 = vmatpush1.bf16.msra.mxu0 %v578
    %644 = vmatprep.subr.bf16.mxu0 %v581
    %645 = vmatpush1.bf16.msra.mxu0 %v580
    %646 = vmatprep.subr.bf16.mxu0 %v583
    %647 = vmatpush1.bf16.msra.mxu0 %v582
    %648 = vmatprep.subr.bf16.mxu0 %v585
    %649 = vmatpush1.bf16.msra.mxu0 %v584
    %650 = vmatprep.subr.bf16.mxu0 %v587
    %651 = vmatpush1.bf16.msra.mxu0 %v586
    %652 = vmatprep.mubr.bf16.mxu0 %v414
    %653 = vmatmul.mubr.bf16.gmra.mrb[0].mxu0 %v413
    %v654 = vpop.f32.mrb[0].mxu0
    %v655 = vadd.f32 %v453, %v654
    %v656 = vpop.f32.mrb[0].mxu0
    %v657 = vadd.f32 %v457, %v656
    %v658 = vpop.f32.mrb[0].mxu0
    %v659 = vpop.f32.mrb[0].mxu0
    %660 = vdwg.mxu0
    %v661 = vmul.f32 %v655, 0.1
    %v662 = vmul.f32 %v657, 0.1
    %v663 = vmax.f32 %v655, %v661
    %v664 = vmax.f32 %v657, %v662
    %v665 = vpack.c.bf16 %v663, %v663
    %v666 = vpack.c.bf16 %v664, %v664
    %v667 = vld [vmem:[#allocation5 + $0x210] sm:$0xff]
    %v668 = vld [vmem:[#allocation5 + $0x218] sm:$0xff]
    %v669 = vld [vmem:[#allocation5 + $0x220] sm:$0xff]
    %v670 = vld [vmem:[#allocation5 + $0x228] sm:$0xff]
    %v671 = vld [vmem:[#allocation5 + $0x230] sm:$0xff]
    %v672 = vld [vmem:[#allocation5 + $0x238] sm:$0xff]
    %v673 = vld [vmem:[#allocation5 + $0x240] sm:$0xff]
    %v674 = vld [vmem:[#allocation5 + $0x248] sm:$0xff]
    %v675 = vld [vmem:[#allocation5 + $0x250] sm:$0xff]
    %v676 = vld [vmem:[#allocation5 + $0x258] sm:$0xff]
    %v677 = vld [vmem:[#allocation5 + $0x260] sm:$0xff]
    %v678 = vld [vmem:[#allocation5 + $0x268] sm:$0xff]
    %v679 = vld [vmem:[#allocation5 + $0x270] sm:$0xff]
    %v680 = vld [vmem:[#allocation5 + $0x278] sm:$0xff]
    %v681 = vld [vmem:[#allocation5 + $0x280] sm:$0xff]
    %v682 = vld [vmem:[#allocation5 + $0x288] sm:$0xff]
    %v683 = vld [vmem:[#allocation5 + $0x290] sm:$0xff]
    %v684 = vld [vmem:[#allocation5 + $0x298] sm:$0xff]
    %v685 = vld [vmem:[#allocation5 + $0x2a0] sm:$0xff]
    %v686 = vld [vmem:[#allocation5 + $0x2a8] sm:$0xff]
    %v687 = vld [vmem:[#allocation5 + $0x2b0] sm:$0xff]
    %v688 = vld [vmem:[#allocation5 + $0x2b8] sm:$0xff]
    %v689 = vld [vmem:[#allocation5 + $0x2c0] sm:$0xff]
    %v690 = vld [vmem:[#allocation5 + $0x2c8] sm:$0xff]
    %v691 = vld [vmem:[#allocation5 + $0x2d0] sm:$0xff]
    %v692 = vld [vmem:[#allocation5 + $0x2d8] sm:$0xff]
    %v693 = vld [vmem:[#allocation5 + $0x2e0] sm:$0xff]
    %v694 = vld [vmem:[#allocation5 + $0x2e8] sm:$0xff]
    %v695 = vld [vmem:[#allocation5 + $0x2f0] sm:$0xff]
    %v696 = vld [vmem:[#allocation5 + $0x2f8] sm:$0xff]
    %v697 = vld [vmem:[#allocation5 + $0x300] sm:$0xff]
    %v698 = vld [vmem:[#allocation5 + $0x308] sm:$0xff]
    %s699 = scalar_lea.vmem [#allocation10], 3
    %v700 = vld [vmem:[%s699] ss:$8 sm:$0x3]
    %v702 = vlaneseq
    %v703 = vshrl.u32 %v702, 7
    %v704 = vsub.s32 0, %v703
    %v705 = vrot.slane %v700, %v704
    %v706 = vlaneseq
    %v707 = vshrl.u32 %v706, 7
    %v708 = vsub.s32 1, %v707
    %v709 = vrot.slane %v700, %v708
    %v744 = vunpack.c.l.b16 %v667
    %v745 = vunpack.c.h.b16 %v667
    %v746 = vunpack.c.l.b16 %v668
    %v747 = vunpack.c.h.b16 %v668
    %v748 = vunpack.c.l.b16 %v669
    %v749 = vunpack.c.h.b16 %v669
    %v750 = vunpack.c.l.b16 %v670
    %v751 = vunpack.c.h.b16 %v670
    %v752 = vunpack.c.l.b16 %v671
    %v753 = vunpack.c.h.b16 %v671
    %v754 = vunpack.c.l.b16 %v672
    %v755 = vunpack.c.h.b16 %v672
    %v756 = vunpack.c.l.b16 %v673
    %v757 = vunpack.c.h.b16 %v673
    %v758 = vunpack.c.l.b16 %v674
    %v759 = vunpack.c.h.b16 %v674
    %v760 = vunpack.c.l.b16 %v675
    %v761 = vunpack.c.h.b16 %v675
    %v762 = vunpack.c.l.b16 %v676
    %v763 = vunpack.c.h.b16 %v676
    %v764 = vunpack.c.l.b16 %v677
    %v765 = vunpack.c.h.b16 %v677
    %v766 = vunpack.c.l.b16 %v678
    %v767 = vunpack.c.h.b16 %v678
    %v768 = vunpack.c.l.b16 %v679
    %v769 = vunpack.c.h.b16 %v679
    %v770 = vunpack.c.l.b16 %v680
    %v771 = vunpack.c.h.b16 %v680
    %v772 = vunpack.c.l.b16 %v681
    %v773 = vunpack.c.h.b16 %v681
    %v774 = vunpack.c.l.b16 %v682
    %v775 = vunpack.c.h.b16 %v682
    %v776 = vunpack.c.l.b16 %v683
    %v777 = vunpack.c.h.b16 %v683
    %v778 = vunpack.c.l.b16 %v684
    %v779 = vunpack.c.h.b16 %v684
    %v780 = vunpack.c.l.b16 %v685
    %v781 = vunpack.c.h.b16 %v685
    %v782 = vunpack.c.l.b16 %v686
    %v783 = vunpack.c.h.b16 %v686
    %v784 = vunpack.c.l.b16 %v687
    %v785 = vunpack.c.h.b16 %v687
    %v786 = vunpack.c.l.b16 %v688
    %v787 = vunpack.c.h.b16 %v688
    %v788 = vunpack.c.l.b16 %v689
    %v789 = vunpack.c.h.b16 %v689
    %v790 = vunpack.c.l.b16 %v690
    %v791 = vunpack.c.h.b16 %v690
    %v792 = vunpack.c.l.b16 %v691
    %v793 = vunpack.c.h.b16 %v691
    %v794 = vunpack.c.l.b16 %v692
    %v795 = vunpack.c.h.b16 %v692
    %v796 = vunpack.c.l.b16 %v693
    %v797 = vunpack.c.h.b16 %v693
    %v798 = vunpack.c.l.b16 %v694
    %v799 = vunpack.c.h.b16 %v694
    %v800 = vunpack.c.l.b16 %v695
    %v801 = vunpack.c.h.b16 %v695
    %v802 = vunpack.c.l.b16 %v696
    %v803 = vunpack.c.h.b16 %v696
    %v804 = vunpack.c.l.b16 %v697
    %v805 = vunpack.c.h.b16 %v697
    %v806 = vunpack.c.l.b16 %v698
    %v807 = vunpack.c.h.b16 %v698
    %v808 = vpack.c.b16 %v746, %v744
    %v809 = vpack.c.b16 %v747, %v745
    %v810 = vpack.c.b16 %v750, %v748
    %v811 = vpack.c.b16 %v751, %v749
    %v812 = vpack.c.b16 %v754, %v752
    %v813 = vpack.c.b16 %v755, %v753
    %v814 = vpack.c.b16 %v758, %v756
    %v815 = vpack.c.b16 %v759, %v757
    %v816 = vpack.c.b16 %v762, %v760
    %v817 = vpack.c.b16 %v763, %v761
    %v818 = vpack.c.b16 %v766, %v764
    %v819 = vpack.c.b16 %v767, %v765
    %v820 = vpack.c.b16 %v770, %v768
    %v821 = vpack.c.b16 %v771, %v769
    %v822 = vpack.c.b16 %v774, %v772
    %v823 = vpack.c.b16 %v775, %v773
    %v824 = vpack.c.b16 %v778, %v776
    %v825 = vpack.c.b16 %v779, %v777
    %v826 = vpack.c.b16 %v782, %v780
    %v827 = vpack.c.b16 %v783, %v781
    %v828 = vpack.c.b16 %v786, %v784
    %v829 = vpack.c.b16 %v787, %v785
    %v830 = vpack.c.b16 %v790, %v788
    %v831 = vpack.c.b16 %v791, %v789
    %v832 = vpack.c.b16 %v794, %v792
    %v833 = vpack.c.b16 %v795, %v793
    %v834 = vpack.c.b16 %v798, %v796
    %v835 = vpack.c.b16 %v799, %v797
    %v836 = vpack.c.b16 %v802, %v800
    %v837 = vpack.c.b16 %v803, %v801
    %v838 = vpack.c.b16 %v806, %v804
    %v839 = vpack.c.b16 %v807, %v805
    %872 = vmatprep.subr.bf16.mxu0 %v809
    %873 = vmatpush1.bf16.msra.mxu0 %v808
    %874 = vmatprep.subr.bf16.mxu0 %v811
    %875 = vmatpush1.bf16.msra.mxu0 %v810
    %876 = vmatprep.subr.bf16.mxu0 %v813
    %877 = vmatpush1.bf16.msra.mxu0 %v812
    %878 = vmatprep.subr.bf16.mxu0 %v815
    %879 = vmatpush1.bf16.msra.mxu0 %v814
    %880 = vmatprep.subr.bf16.mxu0 %v817
    %881 = vmatpush1.bf16.msra.mxu0 %v816
    %882 = vmatprep.subr.bf16.mxu0 %v819
    %883 = vmatpush1.bf16.msra.mxu0 %v818
    %884 = vmatprep.subr.bf16.mxu0 %v821
    %885 = vmatpush1.bf16.msra.mxu0 %v820
    %886 = vmatprep.subr.bf16.mxu0 %v823
    %887 = vmatpush1.bf16.msra.mxu0 %v822
    %888 = vmatprep.subr.bf16.mxu0 %v825
    %889 = vmatpush1.bf16.msra.mxu0 %v824
    %890 = vmatprep.subr.bf16.mxu0 %v827
    %891 = vmatpush1.bf16.msra.mxu0 %v826
    %892 = vmatprep.subr.bf16.mxu0 %v829
    %893 = vmatpush1.bf16.msra.mxu0 %v828
    %894 = vmatprep.subr.bf16.mxu0 %v831
    %895 = vmatpush1.bf16.msra.mxu0 %v830
    %896 = vmatprep.subr.bf16.mxu0 %v833
    %897 = vmatpush1.bf16.msra.mxu0 %v832
    %898 = vmatprep.subr.bf16.mxu0 %v835
    %899 = vmatpush1.bf16.msra.mxu0 %v834
    %900 = vmatprep.subr.bf16.mxu0 %v837
    %901 = vmatpush1.bf16.msra.mxu0 %v836
    %902 = vmatprep.subr.bf16.mxu0 %v839
    %903 = vmatpush1.bf16.msra.mxu0 %v838
    %904 = vmatprep.mubr.bf16.mxu0 %v666
    %905 = vmatmul.mubr.bf16.gmra.mrb[0].mxu0 %v665
    %v906 = vpop.f32.mrb[0].mxu0
    %v907 = vadd.f32 %v705, %v906
    %v908 = vpop.f32.mrb[0].mxu0
    %v909 = vadd.f32 %v709, %v908
    %v910 = vpop.f32.mrb[0].mxu0
    %v911 = vpop.f32.mrb[0].mxu0
    %912 = vdwg.mxu0
    %v913 = vmul.f32 %v907, 0.1
    %v914 = vmul.f32 %v909, 0.1
    %v915 = vmax.f32 %v907, %v913
    %v916 = vmax.f32 %v909, %v914
    %v917 = vpack.c.bf16 %v915, %v915
    %v918 = vpack.c.bf16 %v916, %v916
    %v919 = vld [vmem:[#allocation7] sm:$0xff]
    %v920 = vld [vmem:[#allocation7 + $0x8] sm:$0xff]
    %v921 = vld [vmem:[#allocation7 + $0x10] sm:$0xff]
    %v922 = vld [vmem:[#allocation7 + $0x18] sm:$0xff]
    %v923 = vld [vmem:[#allocation7 + $0x20] sm:$0xff]
    %v924 = vld [vmem:[#allocation7 + $0x28] sm:$0xff]
    %v925 = vld [vmem:[#allocation7 + $0x30] sm:$0xff]
    %v926 = vld [vmem:[#allocation7 + $0x38] sm:$0xff]
    %v927 = vld [vmem:[#allocation7 + $0x40] sm:$0xff]
    %v928 = vld [vmem:[#allocation7 + $0x48] sm:$0xff]
    %v929 = vld [vmem:[#allocation7 + $0x50] sm:$0xff]
    %v930 = vld [vmem:[#allocation7 + $0x58] sm:$0xff]
    %v931 = vld [vmem:[#allocation7 + $0x60] sm:$0xff]
    %v932 = vld [vmem:[#allocation7 + $0x68] sm:$0xff]
    %v933 = vld [vmem:[#allocation7 + $0x70] sm:$0xff]
    %v934 = vld [vmem:[#allocation7 + $0x78] sm:$0xff]
    %v935 = vld [vmem:[#allocation7 + $0x80] sm:$0xff]
    %v936 = vld [vmem:[#allocation7 + $0x88] sm:$0xff]
    %v937 = vld [vmem:[#allocation7 + $0x90] sm:$0xff]
    %v938 = vld [vmem:[#allocation7 + $0x98] sm:$0xff]
    %v939 = vld [vmem:[#allocation7 + $0xa0] sm:$0xff]
    %v940 = vld [vmem:[#allocation7 + $0xa8] sm:$0xff]
    %v941 = vld [vmem:[#allocation7 + $0xb0] sm:$0xff]
    %v942 = vld [vmem:[#allocation7 + $0xb8] sm:$0xff]
    %v943 = vld [vmem:[#allocation7 + $0xc0] sm:$0xff]
    %v944 = vld [vmem:[#allocation7 + $0xc8] sm:$0xff]
    %v945 = vld [vmem:[#allocation7 + $0xd0] sm:$0xff]
    %v946 = vld [vmem:[#allocation7 + $0xd8] sm:$0xff]
    %v947 = vld [vmem:[#allocation7 + $0xe0] sm:$0xff]
    %v948 = vld [vmem:[#allocation7 + $0xe8] sm:$0xff]
    %v949 = vld [vmem:[#allocation7 + $0xf0] sm:$0xff]
    %v950 = vld [vmem:[#allocation7 + $0xf8] sm:$0xff]
    %v951 = vld [vmem:[#allocation7 + $0x100] sm:$0xff]
    %v952 = vld [vmem:[#allocation7 + $0x108] sm:$0xff]
    %v953 = vld [vmem:[#allocation7 + $0x110] sm:$0xff]
    %v954 = vld [vmem:[#allocation7 + $0x118] sm:$0xff]
    %v955 = vld [vmem:[#allocation7 + $0x120] sm:$0xff]
    %v956 = vld [vmem:[#allocation7 + $0x128] sm:$0xff]
    %v957 = vld [vmem:[#allocation7 + $0x130] sm:$0xff]
    %v958 = vld [vmem:[#allocation7 + $0x138] sm:$0xff]
    %v959 = vld [vmem:[#allocation7 + $0x140] sm:$0xff]
    %v960 = vld [vmem:[#allocation7 + $0x148] sm:$0xff]
    %v961 = vld [vmem:[#allocation7 + $0x150] sm:$0xff]
    %v962 = vld [vmem:[#allocation7 + $0x158] sm:$0xff]
    %v963 = vld [vmem:[#allocation7 + $0x160] sm:$0xff]
    %v964 = vld [vmem:[#allocation7 + $0x168] sm:$0xff]
    %v965 = vld [vmem:[#allocation7 + $0x170] sm:$0xff]
    %v966 = vld [vmem:[#allocation7 + $0x178] sm:$0xff]
    %v967 = vld [vmem:[#allocation7 + $0x180] sm:$0xff]
    %v968 = vld [vmem:[#allocation7 + $0x188] sm:$0xff]
    %v969 = vld [vmem:[#allocation7 + $0x190] sm:$0xff]
    %v970 = vld [vmem:[#allocation7 + $0x198] sm:$0xff]
    %v971 = vld [vmem:[#allocation7 + $0x1a0] sm:$0xff]
    %v972 = vld [vmem:[#allocation7 + $0x1a8] sm:$0xff]
    %v973 = vld [vmem:[#allocation7 + $0x1b0] sm:$0xff]
    %v974 = vld [vmem:[#allocation7 + $0x1b8] sm:$0xff]
    %v975 = vld [vmem:[#allocation7 + $0x1c0] sm:$0xff]
    %v976 = vld [vmem:[#allocation7 + $0x1c8] sm:$0xff]
    %v977 = vld [vmem:[#allocation7 + $0x1d0] sm:$0xff]
    %v978 = vld [vmem:[#allocation7 + $0x1d8] sm:$0xff]
    %v979 = vld [vmem:[#allocation7 + $0x1e0] sm:$0xff]
    %v980 = vld [vmem:[#allocation7 + $0x1e8] sm:$0xff]
    %v981 = vld [vmem:[#allocation7 + $0x1f0] sm:$0xff]
    %v982 = vld [vmem:[#allocation7 + $0x1f8] sm:$0xff]
    %s983 = scalar_lea.vmem [#allocation10], 4
    %v984 = vld [vmem:[%s983] ss:$8 sm:$0xf]
    %v986 = vlaneseq
    %v987 = vshrl.u32 %v986, 7
    %v988 = vsub.s32 0, %v987
    %v989 = vrot.slane %v984, %v988
    %v990 = vlaneseq
    %v991 = vshrl.u32 %v990, 7
    %v992 = vsub.s32 1, %v991
    %v993 = vrot.slane %v984, %v992
    %v994 = vlaneseq
    %v995 = vshrl.u32 %v994, 7
    %v996 = vsub.s32 2, %v995
    %v997 = vrot.slane %v984, %v996
    %v998 = vlaneseq
    %v999 = vshrl.u32 %v998, 7
    %v1000 = vsub.s32 3, %v999
    %v1001 = vrot.slane %v984, %v1000
    %v1070 = vunpack.c.l.b16 %v919
    %v1071 = vunpack.c.h.b16 %v919
    %v1072 = vunpack.c.l.b16 %v920
    %v1073 = vunpack.c.h.b16 %v920
    %v1074 = vunpack.c.l.b16 %v921
    %v1075 = vunpack.c.h.b16 %v921
    %v1076 = vunpack.c.l.b16 %v922
    %v1077 = vunpack.c.h.b16 %v922
    %v1078 = vunpack.c.l.b16 %v923
    %v1079 = vunpack.c.h.b16 %v923
    %v1080 = vunpack.c.l.b16 %v924
    %v1081 = vunpack.c.h.b16 %v924
    %v1082 = vunpack.c.l.b16 %v925
    %v1083 = vunpack.c.h.b16 %v925
    %v1084 = vunpack.c.l.b16 %v926
    %v1085 = vunpack.c.h.b16 %v926
    %v1086 = vunpack.c.l.b16 %v927
    %v1087 = vunpack.c.h.b16 %v927
    %v1088 = vunpack.c.l.b16 %v928
    %v1089 = vunpack.c.h.b16 %v928
    %v1090 = vunpack.c.l.b16 %v929
    %v1091 = vunpack.c.h.b16 %v929
    %v1092 = vunpack.c.l.b16 %v930
    %v1093 = vunpack.c.h.b16 %v930
    %v1094 = vunpack.c.l.b16 %v931
    %v1095 = vunpack.c.h.b16 %v931
    %v1096 = vunpack.c.l.b16 %v932
    %v1097 = vunpack.c.h.b16 %v932
    %v1098 = vunpack.c.l.b16 %v933
    %v1099 = vunpack.c.h.b16 %v933
    %v1100 = vunpack.c.l.b16 %v934
    %v1101 = vunpack.c.h.b16 %v934
    %v1102 = vunpack.c.l.b16 %v935
    %v1103 = vunpack.c.h.b16 %v935
    %v1104 = vunpack.c.l.b16 %v936
    %v1105 = vunpack.c.h.b16 %v936
    %v1106 = vunpack.c.l.b16 %v937
    %v1107 = vunpack.c.h.b16 %v937
    %v1108 = vunpack.c.l.b16 %v938
    %v1109 = vunpack.c.h.b16 %v938
    %v1110 = vunpack.c.l.b16 %v939
    %v1111 = vunpack.c.h.b16 %v939
    %v1112 = vunpack.c.l.b16 %v940
    %v1113 = vunpack.c.h.b16 %v940
    %v1114 = vunpack.c.l.b16 %v941
    %v1115 = vunpack.c.h.b16 %v941
    %v1116 = vunpack.c.l.b16 %v942
    %v1117 = vunpack.c.h.b16 %v942
    %v1118 = vunpack.c.l.b16 %v943
    %v1119 = vunpack.c.h.b16 %v943
    %v1120 = vunpack.c.l.b16 %v944
    %v1121 = vunpack.c.h.b16 %v944
    %v1122 = vunpack.c.l.b16 %v945
    %v1123 = vunpack.c.h.b16 %v945
    %v1124 = vunpack.c.l.b16 %v946
    %v1125 = vunpack.c.h.b16 %v946
    %v1126 = vunpack.c.l.b16 %v947
    %v1127 = vunpack.c.h.b16 %v947
    %v1128 = vunpack.c.l.b16 %v948
    %v1129 = vunpack.c.h.b16 %v948
    %v1130 = vunpack.c.l.b16 %v949
    %v1131 = vunpack.c.h.b16 %v949
    %v1132 = vunpack.c.l.b16 %v950
    %v1133 = vunpack.c.h.b16 %v950
    %v1134 = vunpack.c.l.b16 %v951
    %v1135 = vunpack.c.h.b16 %v951
    %v1136 = vunpack.c.l.b16 %v952
    %v1137 = vunpack.c.h.b16 %v952
    %v1138 = vunpack.c.l.b16 %v953
    %v1139 = vunpack.c.h.b16 %v953
    %v1140 = vunpack.c.l.b16 %v954
    %v1141 = vunpack.c.h.b16 %v954
    %v1142 = vunpack.c.l.b16 %v955
    %v1143 = vunpack.c.h.b16 %v955
    %v1144 = vunpack.c.l.b16 %v956
    %v1145 = vunpack.c.h.b16 %v956
    %v1146 = vunpack.c.l.b16 %v957
    %v1147 = vunpack.c.h.b16 %v957
    %v1148 = vunpack.c.l.b16 %v958
    %v1149 = vunpack.c.h.b16 %v958
    %v1150 = vunpack.c.l.b16 %v959
    %v1151 = vunpack.c.h.b16 %v959
    %v1152 = vunpack.c.l.b16 %v960
    %v1153 = vunpack.c.h.b16 %v960
    %v1154 = vunpack.c.l.b16 %v961
    %v1155 = vunpack.c.h.b16 %v961
    %v1156 = vunpack.c.l.b16 %v962
    %v1157 = vunpack.c.h.b16 %v962
    %v1158 = vunpack.c.l.b16 %v963
    %v1159 = vunpack.c.h.b16 %v963
    %v1160 = vunpack.c.l.b16 %v964
    %v1161 = vunpack.c.h.b16 %v964
    %v1162 = vunpack.c.l.b16 %v965
    %v1163 = vunpack.c.h.b16 %v965
    %v1164 = vunpack.c.l.b16 %v966
    %v1165 = vunpack.c.h.b16 %v966
    %v1166 = vunpack.c.l.b16 %v967
    %v1167 = vunpack.c.h.b16 %v967
    %v1168 = vunpack.c.l.b16 %v968
    %v1169 = vunpack.c.h.b16 %v968
    %v1170 = vunpack.c.l.b16 %v969
    %v1171 = vunpack.c.h.b16 %v969
    %v1172 = vunpack.c.l.b16 %v970
    %v1173 = vunpack.c.h.b16 %v970
    %v1174 = vunpack.c.l.b16 %v971
    %v1175 = vunpack.c.h.b16 %v971
    %v1176 = vunpack.c.l.b16 %v972
    %v1177 = vunpack.c.h.b16 %v972
    %v1178 = vunpack.c.l.b16 %v973
    %v1179 = vunpack.c.h.b16 %v973
    %v1180 = vunpack.c.l.b16 %v974
    %v1181 = vunpack.c.h.b16 %v974
    %v1182 = vunpack.c.l.b16 %v975
    %v1183 = vunpack.c.h.b16 %v975
    %v1184 = vunpack.c.l.b16 %v976
    %v1185 = vunpack.c.h.b16 %v976
    %v1186 = vunpack.c.l.b16 %v977
    %v1187 = vunpack.c.h.b16 %v977
    %v1188 = vunpack.c.l.b16 %v978
    %v1189 = vunpack.c.h.b16 %v978
    %v1190 = vunpack.c.l.b16 %v979
    %v1191 = vunpack.c.h.b16 %v979
    %v1192 = vunpack.c.l.b16 %v980
    %v1193 = vunpack.c.h.b16 %v980
    %v1194 = vunpack.c.l.b16 %v981
    %v1195 = vunpack.c.h.b16 %v981
    %v1196 = vunpack.c.l.b16 %v982
    %v1197 = vunpack.c.h.b16 %v982
    %v1198 = vpack.c.b16 %v1074, %v1070
    %v1199 = vpack.c.b16 %v1075, %v1071
    %v1200 = vpack.c.b16 %v1076, %v1072
    %v1201 = vpack.c.b16 %v1077, %v1073
    %v1202 = vpack.c.b16 %v1082, %v1078
    %v1203 = vpack.c.b16 %v1083, %v1079
    %v1204 = vpack.c.b16 %v1084, %v1080
    %v1205 = vpack.c.b16 %v1085, %v1081
    %v1206 = vpack.c.b16 %v1090, %v1086
    %v1207 = vpack.c.b16 %v1091, %v1087
    %v1208 = vpack.c.b16 %v1092, %v1088
    %v1209 = vpack.c.b16 %v1093, %v1089
    %v1210 = vpack.c.b16 %v1098, %v1094
    %v1211 = vpack.c.b16 %v1099, %v1095
    %v1212 = vpack.c.b16 %v1100, %v1096
    %v1213 = vpack.c.b16 %v1101, %v1097
    %v1214 = vpack.c.b16 %v1106, %v1102
    %v1215 = vpack.c.b16 %v1107, %v1103
    %v1216 = vpack.c.b16 %v1108, %v1104
    %v1217 = vpack.c.b16 %v1109, %v1105
    %v1218 = vpack.c.b16 %v1114, %v1110
    %v1219 = vpack.c.b16 %v1115, %v1111
    %v1220 = vpack.c.b16 %v1116, %v1112
    %v1221 = vpack.c.b16 %v1117, %v1113
    %v1222 = vpack.c.b16 %v1122, %v1118
    %v1223 = vpack.c.b16 %v1123, %v1119
    %v1224 = vpack.c.b16 %v1124, %v1120
    %v1225 = vpack.c.b16 %v1125, %v1121
    %v1226 = vpack.c.b16 %v1130, %v1126
    %v1227 = vpack.c.b16 %v1131, %v1127
    %v1228 = vpack.c.b16 %v1132, %v1128
    %v1229 = vpack.c.b16 %v1133, %v1129
    %v1230 = vpack.c.b16 %v1138, %v1134
    %v1231 = vpack.c.b16 %v1139, %v1135
    %v1232 = vpack.c.b16 %v1140, %v1136
    %v1233 = vpack.c.b16 %v1141, %v1137
    %v1234 = vpack.c.b16 %v1146, %v1142
    %v1235 = vpack.c.b16 %v1147, %v1143
    %v1236 = vpack.c.b16 %v1148, %v1144
    %v1237 = vpack.c.b16 %v1149, %v1145
    %v1238 = vpack.c.b16 %v1154, %v1150
    %v1239 = vpack.c.b16 %v1155, %v1151
    %v1240 = vpack.c.b16 %v1156, %v1152
    %v1241 = vpack.c.b16 %v1157, %v1153
    %v1242 = vpack.c.b16 %v1162, %v1158
    %v1243 = vpack.c.b16 %v1163, %v1159
    %v1244 = vpack.c.b16 %v1164, %v1160
    %v1245 = vpack.c.b16 %v1165, %v1161
    %v1246 = vpack.c.b16 %v1170, %v1166
    %v1247 = vpack.c.b16 %v1171, %v1167
    %v1248 = vpack.c.b16 %v1172, %v1168
    %v1249 = vpack.c.b16 %v1173, %v1169
    %v1250 = vpack.c.b16 %v1178, %v1174
    %v1251 = vpack.c.b16 %v1179, %v1175
    %v1252 = vpack.c.b16 %v1180, %v1176
    %v1253 = vpack.c.b16 %v1181, %v1177
    %v1254 = vpack.c.b16 %v1186, %v1182
    %v1255 = vpack.c.b16 %v1187, %v1183
    %v1256 = vpack.c.b16 %v1188, %v1184
    %v1257 = vpack.c.b16 %v1189, %v1185
    %v1258 = vpack.c.b16 %v1194, %v1190
    %v1259 = vpack.c.b16 %v1195, %v1191
    %v1260 = vpack.c.b16 %v1196, %v1192
    %v1261 = vpack.c.b16 %v1197, %v1193
    %1326 = vmatprep.subr.bf16.mxu0 %v1199
    %1327 = vmatpush1.bf16.msra.mxu0 %v1198
    %1328 = vmatprep.subr.bf16.mxu0 %v1203
    %1329 = vmatpush1.bf16.msra.mxu0 %v1202
    %1330 = vmatprep.subr.bf16.mxu0 %v1207
    %1331 = vmatpush1.bf16.msra.mxu0 %v1206
    %1332 = vmatprep.subr.bf16.mxu0 %v1211
    %1333 = vmatpush1.bf16.msra.mxu0 %v1210
    %1334 = vmatprep.subr.bf16.mxu0 %v1215
    %1335 = vmatpush1.bf16.msra.mxu0 %v1214
    %1336 = vmatprep.subr.bf16.mxu0 %v1219
    %1337 = vmatpush1.bf16.msra.mxu0 %v1218
    %1338 = vmatprep.subr.bf16.mxu0 %v1223
    %1339 = vmatpush1.bf16.msra.mxu0 %v1222
    %1340 = vmatprep.subr.bf16.mxu0 %v1227
    %1341 = vmatpush1.bf16.msra.mxu0 %v1226
    %1342 = vmatprep.subr.bf16.mxu0 %v1231
    %1343 = vmatpush1.bf16.msra.mxu0 %v1230
    %1344 = vmatprep.subr.bf16.mxu0 %v1235
    %1345 = vmatpush1.bf16.msra.mxu0 %v1234
    %1346 = vmatprep.subr.bf16.mxu0 %v1239
    %1347 = vmatpush1.bf16.msra.mxu0 %v1238
    %1348 = vmatprep.subr.bf16.mxu0 %v1243
    %1349 = vmatpush1.bf16.msra.mxu0 %v1242
    %1350 = vmatprep.subr.bf16.mxu0 %v1247
    %1351 = vmatpush1.bf16.msra.mxu0 %v1246
    %1352 = vmatprep.subr.bf16.mxu0 %v1251
    %1353 = vmatpush1.bf16.msra.mxu0 %v1250
    %1354 = vmatprep.subr.bf16.mxu0 %v1255
    %1355 = vmatpush1.bf16.msra.mxu0 %v1254
    %1356 = vmatprep.subr.bf16.mxu0 %v1259
    %1357 = vmatpush1.bf16.msra.mxu0 %v1258
    %1358 = vmatprep.mubr.bf16.mxu0 %v918
    %1359 = vmatmul.mubr.bf16.gmra.mrb[0].mxu0 %v917
    %v1360 = vpop.f32.mrb[0].mxu0
    %v1361 = vadd.f32 %v989, %v1360
    %v1362 = vpop.f32.mrb[0].mxu0
    %v1363 = vadd.f32 %v993, %v1362
    %v1364 = vpop.f32.mrb[0].mxu0
    %v1365 = vpop.f32.mrb[0].mxu0
    %1366 = vdwg.mxu0
    %1367 = vmatprep.subr.bf16.mxu0 %v1201
    %1368 = vmatpush1.bf16.msra.mxu0 %v1200
    %1369 = vmatprep.subr.bf16.mxu0 %v1205
    %1370 = vmatpush1.bf16.msra.mxu0 %v1204
    %1371 = vmatprep.subr.bf16.mxu0 %v1209
    %1372 = vmatpush1.bf16.msra.mxu0 %v1208
    %1373 = vmatprep.subr.bf16.mxu0 %v1213
    %1374 = vmatpush1.bf16.msra.mxu0 %v1212
    %1375 = vmatprep.subr.bf16.mxu0 %v1217
    %1376 = vmatpush1.bf16.msra.mxu0 %v1216
    %1377 = vmatprep.subr.bf16.mxu0 %v1221
    %1378 = vmatpush1.bf16.msra.mxu0 %v1220
    %1379 = vmatprep.subr.bf16.mxu0 %v1225
    %1380 = vmatpush1.bf16.msra.mxu0 %v1224
    %1381 = vmatprep.subr.bf16.mxu0 %v1229
    %1382 = vmatpush1.bf16.msra.mxu0 %v1228
    %1383 = vmatprep.subr.bf16.mxu0 %v1233
    %1384 = vmatpush1.bf16.msra.mxu0 %v1232
    %1385 = vmatprep.subr.bf16.mxu0 %v1237
    %1386 = vmatpush1.bf16.msra.mxu0 %v1236
    %1387 = vmatprep.subr.bf16.mxu0 %v1241
    %1388 = vmatpush1.bf16.msra.mxu0 %v1240
    %1389 = vmatprep.subr.bf16.mxu0 %v1245
    %1390 = vmatpush1.bf16.msra.mxu0 %v1244
    %1391 = vmatprep.subr.bf16.mxu0 %v1249
    %1392 = vmatpush1.bf16.msra.mxu0 %v1248
    %1393 = vmatprep.subr.bf16.mxu0 %v1253
    %1394 = vmatpush1.bf16.msra.mxu0 %v1252
    %1395 = vmatprep.subr.bf16.mxu0 %v1257
    %1396 = vmatpush1.bf16.msra.mxu0 %v1256
    %1397 = vmatprep.subr.bf16.mxu0 %v1261
    %1398 = vmatpush1.bf16.msra.mxu0 %v1260
    %1399 = vmatprep.mubr.bf16.mxu0 %v918
    %1400 = vmatmul.mubr.bf16.gmra.mrb[0].mxu0 %v917
    %v1401 = vpop.f32.mrb[0].mxu0
    %v1402 = vadd.f32 %v997, %v1401
    %v1403 = vpop.f32.mrb[0].mxu0
    %v1404 = vadd.f32 %v1001, %v1403
    %v1405 = vpop.f32.mrb[0].mxu0
    %v1406 = vpop.f32.mrb[0].mxu0
    %1407 = vdwg.mxu0
    %v1408 = vmul.f32 %v1361, 0.1
    %v1409 = vmul.f32 %v1363, 0.1
    %v1410 = vmul.f32 %v1402, 0.1
    %v1411 = vmul.f32 %v1404, 0.1
    %v1412 = vmax.f32 %v1361, %v1408
    %v1413 = vmax.f32 %v1363, %v1409
    %v1414 = vmax.f32 %v1402, %v1410
    %v1415 = vmax.f32 %v1404, %v1411
    %v1416 = vpack.c.bf16 %v1412, %v1412
    %v1417 = vpack.c.bf16 %v1413, %v1413
    %v1418 = vpack.c.bf16 %v1414, %v1414
    %v1419 = vpack.c.bf16 %v1415, %v1415
    %v1420 = vld [vmem:[#allocation8] sm:$0xf]
    %v1421 = vld [vmem:[#allocation8 + $0x4] sm:$0xf]
    %v1422 = vld [vmem:[#allocation8 + $0x8] sm:$0xf]
    %v1423 = vld [vmem:[#allocation8 + $0xc] sm:$0xf]
    %v1424 = vld [vmem:[#allocation8 + $0x10] sm:$0xf]
    %v1425 = vld [vmem:[#allocation8 + $0x14] sm:$0xf]
    %v1426 = vld [vmem:[#allocation8 + $0x18] sm:$0xf]
    %v1427 = vld [vmem:[#allocation8 + $0x1c] sm:$0xf]
    %v1428 = vld [vmem:[#allocation8 + $0x20] sm:$0xf]
    %v1429 = vld [vmem:[#allocation8 + $0x24] sm:$0xf]
    %v1430 = vld [vmem:[#allocation8 + $0x28] sm:$0xf]
    %v1431 = vld [vmem:[#allocation8 + $0x2c] sm:$0xf]
    %v1432 = vld [vmem:[#allocation8 + $0x30] sm:$0xf]
    %v1433 = vld [vmem:[#allocation8 + $0x34] sm:$0xf]
    %v1434 = vld [vmem:[#allocation8 + $0x38] sm:$0xf]
    %v1435 = vld [vmem:[#allocation8 + $0x3c] sm:$0xf]
    %v1436 = vld [vmem:[#allocation8 + $0x40] sm:$0xf]
    %v1437 = vld [vmem:[#allocation8 + $0x44] sm:$0xf]
    %v1438 = vld [vmem:[#allocation8 + $0x48] sm:$0xf]
    %v1439 = vld [vmem:[#allocation8 + $0x4c] sm:$0xf]
    %v1440 = vld [vmem:[#allocation8 + $0x50] sm:$0xf]
    %v1441 = vld [vmem:[#allocation8 + $0x54] sm:$0xf]
    %v1442 = vld [vmem:[#allocation8 + $0x58] sm:$0xf]
    %v1443 = vld [vmem:[#allocation8 + $0x5c] sm:$0xf]
    %v1444 = vld [vmem:[#allocation8 + $0x60] sm:$0xf]
    %v1445 = vld [vmem:[#allocation8 + $0x64] sm:$0xf]
    %v1446 = vld [vmem:[#allocation8 + $0x68] sm:$0xf]
    %v1447 = vld [vmem:[#allocation8 + $0x6c] sm:$0xf]
    %v1448 = vld [vmem:[#allocation8 + $0x70] sm:$0xf]
    %v1449 = vld [vmem:[#allocation8 + $0x74] sm:$0xf]
    %v1450 = vld [vmem:[#allocation8 + $0x78] sm:$0xf]
    %v1451 = vld [vmem:[#allocation8 + $0x7c] sm:$0xf]
    %v1452 = vld [vmem:[#allocation8 + $0x80] sm:$0xf]
    %v1453 = vld [vmem:[#allocation8 + $0x84] sm:$0xf]
    %v1454 = vld [vmem:[#allocation8 + $0x88] sm:$0xf]
    %v1455 = vld [vmem:[#allocation8 + $0x8c] sm:$0xf]
    %v1456 = vld [vmem:[#allocation8 + $0x90] sm:$0xf]
    %v1457 = vld [vmem:[#allocation8 + $0x94] sm:$0xf]
    %v1458 = vld [vmem:[#allocation8 + $0x98] sm:$0xf]
    %v1459 = vld [vmem:[#allocation8 + $0x9c] sm:$0xf]
    %v1460 = vld [vmem:[#allocation8 + $0xa0] sm:$0xf]
    %v1461 = vld [vmem:[#allocation8 + $0xa4] sm:$0xf]
    %v1462 = vld [vmem:[#allocation8 + $0xa8] sm:$0xf]
    %v1463 = vld [vmem:[#allocation8 + $0xac] sm:$0xf]
    %v1464 = vld [vmem:[#allocation8 + $0xb0] sm:$0xf]
    %v1465 = vld [vmem:[#allocation8 + $0xb4] sm:$0xf]
    %v1466 = vld [vmem:[#allocation8 + $0xb8] sm:$0xf]
    %v1467 = vld [vmem:[#allocation8 + $0xbc] sm:$0xf]
    %v1468 = vld [vmem:[#allocation8 + $0xc0] sm:$0xf]
    %v1469 = vld [vmem:[#allocation8 + $0xc4] sm:$0xf]
    %v1470 = vld [vmem:[#allocation8 + $0xc8] sm:$0xf]
    %v1471 = vld [vmem:[#allocation8 + $0xcc] sm:$0xf]
    %v1472 = vld [vmem:[#allocation8 + $0xd0] sm:$0xf]
    %v1473 = vld [vmem:[#allocation8 + $0xd4] sm:$0xf]
    %v1474 = vld [vmem:[#allocation8 + $0xd8] sm:$0xf]
    %v1475 = vld [vmem:[#allocation8 + $0xdc] sm:$0xf]
    %v1476 = vld [vmem:[#allocation8 + $0xe0] sm:$0xf]
    %v1477 = vld [vmem:[#allocation8 + $0xe4] sm:$0xf]
    %v1478 = vld [vmem:[#allocation8 + $0xe8] sm:$0xf]
    %v1479 = vld [vmem:[#allocation8 + $0xec] sm:$0xf]
    %v1480 = vld [vmem:[#allocation8 + $0xf0] sm:$0xf]
    %v1481 = vld [vmem:[#allocation8 + $0xf4] sm:$0xf]
    %v1482 = vld [vmem:[#allocation8 + $0xf8] sm:$0xf]
    %v1483 = vld [vmem:[#allocation8 + $0xfc] sm:$0xf]
    %v1484 = vld [vmem:[#allocation10 + $0x5] ss:$0 sm:$0xff]
    %v1549 = vunpack.c.l.b16 %v1420
    %v1550 = vunpack.c.l.b16 %v1421
    %v1551 = vunpack.c.l.b16 %v1422
    %v1552 = vunpack.c.l.b16 %v1423
    %v1553 = vunpack.c.l.b16 %v1424
    %v1554 = vunpack.c.l.b16 %v1425
    %v1555 = vunpack.c.l.b16 %v1426
    %v1556 = vunpack.c.l.b16 %v1427
    %v1557 = vunpack.c.l.b16 %v1428
    %v1558 = vunpack.c.l.b16 %v1429
    %v1559 = vunpack.c.l.b16 %v1430
    %v1560 = vunpack.c.l.b16 %v1431
    %v1561 = vunpack.c.l.b16 %v1432
    %v1562 = vunpack.c.l.b16 %v1433
    %v1563 = vunpack.c.l.b16 %v1434
    %v1564 = vunpack.c.l.b16 %v1435
    %v1565 = vunpack.c.l.b16 %v1436
    %v1566 = vunpack.c.l.b16 %v1437
    %v1567 = vunpack.c.l.b16 %v1438
    %v1568 = vunpack.c.l.b16 %v1439
    %v1569 = vunpack.c.l.b16 %v1440
    %v1570 = vunpack.c.l.b16 %v1441
    %v1571 = vunpack.c.l.b16 %v1442
    %v1572 = vunpack.c.l.b16 %v1443
    %v1573 = vunpack.c.l.b16 %v1444
    %v1574 = vunpack.c.l.b16 %v1445
    %v1575 = vunpack.c.l.b16 %v1446
    %v1576 = vunpack.c.l.b16 %v1447
    %v1577 = vunpack.c.l.b16 %v1448
    %v1578 = vunpack.c.l.b16 %v1449
    %v1579 = vunpack.c.l.b16 %v1450
    %v1580 = vunpack.c.l.b16 %v1451
    %v1581 = vunpack.c.l.b16 %v1452
    %v1582 = vunpack.c.l.b16 %v1453
    %v1583 = vunpack.c.l.b16 %v1454
    %v1584 = vunpack.c.l.b16 %v1455
    %v1585 = vunpack.c.l.b16 %v1456
    %v1586 = vunpack.c.l.b16 %v1457
    %v1587 = vunpack.c.l.b16 %v1458
    %v1588 = vunpack.c.l.b16 %v1459
    %v1589 = vunpack.c.l.b16 %v1460
    %v1590 = vunpack.c.l.b16 %v1461
    %v1591 = vunpack.c.l.b16 %v1462
    %v1592 = vunpack.c.l.b16 %v1463
    %v1593 = vunpack.c.l.b16 %v1464
    %v1594 = vunpack.c.l.b16 %v1465
    %v1595 = vunpack.c.l.b16 %v1466
    %v1596 = vunpack.c.l.b16 %v1467
    %v1597 = vunpack.c.l.b16 %v1468
    %v1598 = vunpack.c.l.b16 %v1469
    %v1599 = vunpack.c.l.b16 %v1470
    %v1600 = vunpack.c.l.b16 %v1471
    %v1601 = vunpack.c.l.b16 %v1472
    %v1602 = vunpack.c.l.b16 %v1473
    %v1603 = vunpack.c.l.b16 %v1474
    %v1604 = vunpack.c.l.b16 %v1475
    %v1605 = vunpack.c.l.b16 %v1476
    %v1606 = vunpack.c.l.b16 %v1477
    %v1607 = vunpack.c.l.b16 %v1478
    %v1608 = vunpack.c.l.b16 %v1479
    %v1609 = vunpack.c.l.b16 %v1480
    %v1610 = vunpack.c.l.b16 %v1481
    %v1611 = vunpack.c.l.b16 %v1482
    %v1612 = vunpack.c.l.b16 %v1483
    %v1613 = vpack.c.b16 %v1550, %v1549
    %v1614 = vpack.c.b16 %v1552, %v1551
    %v1615 = vpack.c.b16 %v1554, %v1553
    %v1616 = vpack.c.b16 %v1556, %v1555
    %v1617 = vpack.c.b16 %v1558, %v1557
    %v1618 = vpack.c.b16 %v1560, %v1559
    %v1619 = vpack.c.b16 %v1562, %v1561
    %v1620 = vpack.c.b16 %v1564, %v1563
    %v1621 = vpack.c.b16 %v1566, %v1565
    %v1622 = vpack.c.b16 %v1568, %v1567
    %v1623 = vpack.c.b16 %v1570, %v1569
    %v1624 = vpack.c.b16 %v1572, %v1571
    %v1625 = vpack.c.b16 %v1574, %v1573
    %v1626 = vpack.c.b16 %v1576, %v1575
    %v1627 = vpack.c.b16 %v1578, %v1577
    %v1628 = vpack.c.b16 %v1580, %v1579
    %v1629 = vpack.c.b16 %v1582, %v1581
    %v1630 = vpack.c.b16 %v1584, %v1583
    %v1631 = vpack.c.b16 %v1586, %v1585
    %v1632 = vpack.c.b16 %v1588, %v1587
    %v1633 = vpack.c.b16 %v1590, %v1589
    %v1634 = vpack.c.b16 %v1592, %v1591
    %v1635 = vpack.c.b16 %v1594, %v1593
    %v1636 = vpack.c.b16 %v1596, %v1595
    %v1637 = vpack.c.b16 %v1598, %v1597
    %v1638 = vpack.c.b16 %v1600, %v1599
    %v1639 = vpack.c.b16 %v1602, %v1601
    %v1640 = vpack.c.b16 %v1604, %v1603
    %v1641 = vpack.c.b16 %v1606, %v1605
    %v1642 = vpack.c.b16 %v1608, %v1607
    %v1643 = vpack.c.b16 %v1610, %v1609
    %v1644 = vpack.c.b16 %v1612, %v1611
    %1677 = vmatprep.subr.bf16.mxu0 0
    %1678 = vmatpush1.bf16.msra.mxu0 %v1613
    %1679 = vmatprep.subr.bf16.mxu0 0
    %1680 = vmatpush1.bf16.msra.mxu0 %v1614
    %1681 = vmatprep.subr.bf16.mxu0 0
    %1682 = vmatpush1.bf16.msra.mxu0 %v1615
    %1683 = vmatprep.subr.bf16.mxu0 0
    %1684 = vmatpush1.bf16.msra.mxu0 %v1616
    %1685 = vmatprep.subr.bf16.mxu0 0
    %1686 = vmatpush1.bf16.msra.mxu0 %v1617
    %1687 = vmatprep.subr.bf16.mxu0 0
    %1688 = vmatpush1.bf16.msra.mxu0 %v1618
    %1689 = vmatprep.subr.bf16.mxu0 0
    %1690 = vmatpush1.bf16.msra.mxu0 %v1619
    %1691 = vmatprep.subr.bf16.mxu0 0
    %1692 = vmatpush1.bf16.msra.mxu0 %v1620
    %1693 = vmatprep.subr.bf16.mxu0 0
    %1694 = vmatpush1.bf16.msra.mxu0 %v1621
    %1695 = vmatprep.subr.bf16.mxu0 0
    %1696 = vmatpush1.bf16.msra.mxu0 %v1622
    %1697 = vmatprep.subr.bf16.mxu0 0
    %1698 = vmatpush1.bf16.msra.mxu0 %v1623
    %1699 = vmatprep.subr.bf16.mxu0 0
    %1700 = vmatpush1.bf16.msra.mxu0 %v1624
    %1701 = vmatprep.subr.bf16.mxu0 0
    %1702 = vmatpush1.bf16.msra.mxu0 %v1625
    %1703 = vmatprep.subr.bf16.mxu0 0
    %1704 = vmatpush1.bf16.msra.mxu0 %v1626
    %1705 = vmatprep.subr.bf16.mxu0 0
    %1706 = vmatpush1.bf16.msra.mxu0 %v1627
    %1707 = vmatprep.subr.bf16.mxu0 0
    %1708 = vmatpush1.bf16.msra.mxu0 %v1628
    %1709 = vmatprep.mubr.bf16.mxu0 %v1417
    %1710 = vmatmul.mubr.bf16.gmra.mrb[0].mxu0 %v1416
    %v1711 = vpop.f32.mrb[0].mxu0
    %v1712 = vadd.f32 %v1484, %v1711
    %v1713 = vpop.f32.mrb[0].mxu0
    %v1714 = vpop.f32.mrb[0].mxu0
    %v1715 = vpop.f32.mrb[0].mxu0
    %1716 = vdwg.mxu0
    %1717 = vmatprep.subr.bf16.mxu0 0
    %1718 = vmatpush1.bf16.msra.mxu0 %v1629
    %1719 = vmatprep.subr.bf16.mxu0 0
    %1720 = vmatpush1.bf16.msra.mxu0 %v1630
    %1721 = vmatprep.subr.bf16.mxu0 0
    %1722 = vmatpush1.bf16.msra.mxu0 %v1631
    %1723 = vmatprep.subr.bf16.mxu0 0
    %1724 = vmatpush1.bf16.msra.mxu0 %v1632
    %1725 = vmatprep.subr.bf16.mxu0 0
    %1726 = vmatpush1.bf16.msra.mxu0 %v1633
    %1727 = vmatprep.subr.bf16.mxu0 0
    %1728 = vmatpush1.bf16.msra.mxu0 %v1634
    %1729 = vmatprep.subr.bf16.mxu0 0
    %1730 = vmatpush1.bf16.msra.mxu0 %v1635
    %1731 = vmatprep.subr.bf16.mxu0 0
    %1732 = vmatpush1.bf16.msra.mxu0 %v1636
    %1733 = vmatprep.subr.bf16.mxu0 0
    %1734 = vmatpush1.bf16.msra.mxu0 %v1637
    %1735 = vmatprep.subr.bf16.mxu0 0
    %1736 = vmatpush1.bf16.msra.mxu0 %v1638
    %1737 = vmatprep.subr.bf16.mxu0 0
    %1738 = vmatpush1.bf16.msra.mxu0 %v1639
    %1739 = vmatprep.subr.bf16.mxu0 0
    %1740 = vmatpush1.bf16.msra.mxu0 %v1640
    %1741 = vmatprep.subr.bf16.mxu0 0
    %1742 = vmatpush1.bf16.msra.mxu0 %v1641
    %1743 = vmatprep.subr.bf16.mxu0 0
    %1744 = vmatpush1.bf16.msra.mxu0 %v1642
    %1745 = vmatprep.subr.bf16.mxu0 0
    %1746 = vmatpush1.bf16.msra.mxu0 %v1643
    %1747 = vmatprep.subr.bf16.mxu0 0
    %1748 = vmatpush1.bf16.msra.mxu0 %v1644
    %1749 = vmatprep.mubr.bf16.mxu0 %v1419
    %1750 = vmatmul.mubr.bf16.gmra.mrb[0].mxu0 %v1418
    %v1751 = vpop.f32.mrb[0].mxu0
    %v1752 = vadd.f32 %v1712, %v1751
    %v1753 = vpop.f32.mrb[0].mxu0
    %v1754 = vpop.f32.mrb[0].mxu0
    %v1755 = vpop.f32.mrb[0].mxu0
    %1756 = vdwg.mxu0
    %v1757 = vmul.f32 %v1752, 0.1
    %v1758 = vmax.f32 %v1752, %v1757
    %v1759 = vld [vmem:[#allocation8 + $0x100] sm:$0xf]
    %v1760 = vld [vmem:[#allocation8 + $0x104] sm:$0xf]
    %v1761 = vld [vmem:[#allocation8 + $0x108] sm:$0xf]
    %v1762 = vld [vmem:[#allocation8 + $0x10c] sm:$0xf]
    %v1763 = vld [vmem:[#allocation8 + $0x110] sm:$0xf]
    %v1764 = vld [vmem:[#allocation8 + $0x114] sm:$0xf]
    %v1765 = vld [vmem:[#allocation8 + $0x118] sm:$0xf]
    %v1766 = vld [vmem:[#allocation8 + $0x11c] sm:$0xf]
    %v1767 = vld [vmem:[#allocation8 + $0x120] sm:$0xf]
    %v1768 = vld [vmem:[#allocation8 + $0x124] sm:$0xf]
    %v1769 = vld [vmem:[#allocation8 + $0x128] sm:$0xf]
    %v1770 = vld [vmem:[#allocation8 + $0x12c] sm:$0xf]
    %v1771 = vld [vmem:[#allocation8 + $0x130] sm:$0xf]
    %v1772 = vld [vmem:[#allocation8 + $0x134] sm:$0xf]
    %v1773 = vld [vmem:[#allocation8 + $0x138] sm:$0xf]
    %v1774 = vld [vmem:[#allocation8 + $0x13c] sm:$0xf]
    %v1775 = vpack.c.bf16 %v1758, %v1758
    %v1776 = vld [vmem:[#allocation10 + $0x6] ss:$0 sm:$0xff]
    %v1793 = vunpack.c.l.b16 %v1759
    %v1794 = vunpack.c.l.b16 %v1760
    %v1795 = vunpack.c.l.b16 %v1761
    %v1796 = vunpack.c.l.b16 %v1762
    %v1797 = vunpack.c.l.b16 %v1763
    %v1798 = vunpack.c.l.b16 %v1764
    %v1799 = vunpack.c.l.b16 %v1765
    %v1800 = vunpack.c.l.b16 %v1766
    %v1801 = vunpack.c.l.b16 %v1767
    %v1802 = vunpack.c.l.b16 %v1768
    %v1803 = vunpack.c.l.b16 %v1769
    %v1804 = vunpack.c.l.b16 %v1770
    %v1805 = vunpack.c.l.b16 %v1771
    %v1806 = vunpack.c.l.b16 %v1772
    %v1807 = vunpack.c.l.b16 %v1773
    %v1808 = vunpack.c.l.b16 %v1774
    %v1809 = vpack.c.b16 %v1794, %v1793
    %v1810 = vpack.c.b16 %v1796, %v1795
    %v1811 = vpack.c.b16 %v1798, %v1797
    %v1812 = vpack.c.b16 %v1800, %v1799
    %v1813 = vpack.c.b16 %v1802, %v1801
    %v1814 = vpack.c.b16 %v1804, %v1803
    %v1815 = vpack.c.b16 %v1806, %v1805
    %v1816 = vpack.c.b16 %v1808, %v1807
    %1825 = vmatprep.subr.bf16.mxu0 0
    %1826 = vmatpush1.bf16.msra.mxu0 %v1809
    %1827 = vmatprep.subr.bf16.mxu0 0
    %1828 = vmatpush1.bf16.msra.mxu0 %v1810
    %1829 = vmatprep.subr.bf16.mxu0 0
    %1830 = vmatpush1.bf16.msra.mxu0 %v1811
    %1831 = vmatprep.subr.bf16.mxu0 0
    %1832 = vmatpush1.bf16.msra.mxu0 %v1812
    %1833 = vmatprep.subr.bf16.mxu0 0
    %1834 = vmatpush1.bf16.msra.mxu0 %v1813
    %1835 = vmatprep.subr.bf16.mxu0 0
    %1836 = vmatpush1.bf16.msra.mxu0 %v1814
    %1837 = vmatprep.subr.bf16.mxu0 0
    %1838 = vmatpush1.bf16.msra.mxu0 %v1815
    %1839 = vmatprep.subr.bf16.mxu0 0
    %1840 = vmatpush1.bf16.msra.mxu0 %v1816
    %1841 = vmatprep.subr.bf16.mxu0 0
    %1842 = vmatpush1.bf16.msra.mxu0 0
    %1843 = vmatprep.subr.bf16.mxu0 0
    %1844 = vmatpush1.bf16.msra.mxu0 0
    %1845 = vmatprep.subr.bf16.mxu0 0
    %1846 = vmatpush1.bf16.msra.mxu0 0
    %1847 = vmatprep.subr.bf16.mxu0 0
    %1848 = vmatpush1.bf16.msra.mxu0 0
    %1849 = vmatprep.subr.bf16.mxu0 0
    %1850 = vmatpush1.bf16.msra.mxu0 0
    %1851 = vmatprep.subr.bf16.mxu0 0
    %1852 = vmatpush1.bf16.msra.mxu0 0
    %1853 = vmatprep.subr.bf16.mxu0 0
    %1854 = vmatpush1.bf16.msra.mxu0 0
    %1855 = vmatprep.subr.bf16.mxu0 0
    %1856 = vmatpush1.bf16.msra.mxu0 0
    %1857 = vmatprep.mubr.bf16.mxu0 0
    %1858 = vmatmul.mubr.bf16.gmra.mrb[0].mxu0 %v1775
    %v1859 = vpop.f32.mrb[0].mxu0
    %v1860 = vadd.f32 %v1776, %v1859
    %v1861 = vpop.f32.mrb[0].mxu0
    %v1862 = vpop.f32.mrb[0].mxu0
    %v1863 = vpop.f32.mrb[0].mxu0
    %1864 = vdwg.mxu0
    %v1865 = vmul.f32 %v1860, 0.1
    %v1866 = vmax.f32 %v1860, %v1865
    %v1867 = vld [vmem:[#allocation8 + $0x140] sm:$0xf]
    %v1868 = vld [vmem:[#allocation8 + $0x144] sm:$0xf]
    %v1869 = vld [vmem:[#allocation8 + $0x148] sm:$0xf]
    %v1870 = vld [vmem:[#allocation8 + $0x14c] sm:$0xf]
    %v1871 = vld [vmem:[#allocation8 + $0x150] sm:$0xf]
    %v1872 = vld [vmem:[#allocation8 + $0x154] sm:$0xf]
    %v1873 = vld [vmem:[#allocation8 + $0x158] sm:$0xf]
    %v1874 = vld [vmem:[#allocation8 + $0x15c] sm:$0xf]
    %v1875 = vld [vmem:[#allocation8 + $0x160] sm:$0xf]
    %v1876 = vld [vmem:[#allocation8 + $0x164] sm:$0xf]
    %v1877 = vld [vmem:[#allocation8 + $0x168] sm:$0xf]
    %v1878 = vld [vmem:[#allocation8 + $0x16c] sm:$0xf]
    %v1879 = vld [vmem:[#allocation8 + $0x170] sm:$0xf]
    %v1880 = vld [vmem:[#allocation8 + $0x174] sm:$0xf]
    %v1881 = vld [vmem:[#allocation8 + $0x178] sm:$0xf]
    %v1882 = vld [vmem:[#allocation8 + $0x17c] sm:$0xf]
    %v1883 = vpack.c.bf16 %v1866, %v1866
    %v1884 = vld [vmem:[#allocation10 + $0x7] ss:$0 sm:$0xff]
    %v1901 = vunpack.c.l.b16 %v1867
    %v1902 = vunpack.c.l.b16 %v1868
    %v1903 = vunpack.c.l.b16 %v1869
    %v1904 = vunpack.c.l.b16 %v1870
    %v1905 = vunpack.c.l.b16 %v1871
    %v1906 = vunpack.c.l.b16 %v1872
    %v1907 = vunpack.c.l.b16 %v1873
    %v1908 = vunpack.c.l.b16 %v1874
    %v1909 = vunpack.c.l.b16 %v1875
    %v1910 = vunpack.c.l.b16 %v1876
    %v1911 = vunpack.c.l.b16 %v1877
    %v1912 = vunpack.c.l.b16 %v1878
    %v1913 = vunpack.c.l.b16 %v1879
    %v1914 = vunpack.c.l.b16 %v1880
    %v1915 = vunpack.c.l.b16 %v1881
    %v1916 = vunpack.c.l.b16 %v1882
    %v1917 = vpack.c.b16 %v1902, %v1901
    %v1918 = vpack.c.b16 %v1904, %v1903
    %v1919 = vpack.c.b16 %v1906, %v1905
    %v1920 = vpack.c.b16 %v1908, %v1907
    %v1921 = vpack.c.b16 %v1910, %v1909
    %v1922 = vpack.c.b16 %v1912, %v1911
    %v1923 = vpack.c.b16 %v1914, %v1913
    %v1924 = vpack.c.b16 %v1916, %v1915
    %1933 = vmatprep.subr.bf16.mxu0 0
    %1934 = vmatpush1.bf16.msra.mxu0 %v1917
    %1935 = vmatprep.subr.bf16.mxu0 0
    %1936 = vmatpush1.bf16.msra.mxu0 %v1918
    %1937 = vmatprep.subr.bf16.mxu0 0
    %1938 = vmatpush1.bf16.msra.mxu0 %v1919
    %1939 = vmatprep.subr.bf16.mxu0 0
    %1940 = vmatpush1.bf16.msra.mxu0 %v1920
    %1941 = vmatprep.subr.bf16.mxu0 0
    %1942 = vmatpush1.bf16.msra.mxu0 %v1921
    %1943 = vmatprep.subr.bf16.mxu0 0
    %1944 = vmatpush1.bf16.msra.mxu0 %v1922
    %1945 = vmatprep.subr.bf16.mxu0 0
    %1946 = vmatpush1.bf16.msra.mxu0 %v1923
    %1947 = vmatprep.subr.bf16.mxu0 0
    %1948 = vmatpush1.bf16.msra.mxu0 %v1924
    %1949 = vmatprep.subr.bf16.mxu0 0
    %1950 = vmatpush1.bf16.msra.mxu0 0
    %1951 = vmatprep.subr.bf16.mxu0 0
    %1952 = vmatpush1.bf16.msra.mxu0 0
    %1953 = vmatprep.subr.bf16.mxu0 0
    %1954 = vmatpush1.bf16.msra.mxu0 0
    %1955 = vmatprep.subr.bf16.mxu0 0
    %1956 = vmatpush1.bf16.msra.mxu0 0
    %1957 = vmatprep.subr.bf16.mxu0 0
    %1958 = vmatpush1.bf16.msra.mxu0 0
    %1959 = vmatprep.subr.bf16.mxu0 0
    %1960 = vmatpush1.bf16.msra.mxu0 0
    %1961 = vmatprep.subr.bf16.mxu0 0
    %1962 = vmatpush1.bf16.msra.mxu0 0
    %1963 = vmatprep.subr.bf16.mxu0 0
    %1964 = vmatpush1.bf16.msra.mxu0 0
    %1965 = vmatprep.mubr.bf16.mxu0 0
    %1966 = vmatmul.mubr.bf16.gmra.mrb[0].mxu0 %v1883
    %v1967 = vpop.f32.mrb[0].mxu0
    %v1968 = vadd.f32 %v1884, %v1967
    %v1969 = vpop.f32.mrb[0].mxu0
    %v1970 = vpop.f32.mrb[0].mxu0
    %v1971 = vpop.f32.mrb[0].mxu0
    %1972 = vdwg.mxu0
    %v1973 = vlaneseq
    %v1974 = vand.u32 %v1973, 127
    %vm1975 = vcmp.ge.s32.totalorder %v1974, 64
    %vm1976 = vcmp.lt.s32.totalorder %v1974, 67
    %vm1977 = vmand %vm1975, %vm1976
    %vm1978 = vcmp.ge.s32.totalorder %v1974, 70
    %vm1979 = vcmp.lt.s32.totalorder %v1974, 73
    %vm1980 = vmand %vm1978, %vm1979
    %vm1981 = vmand %vm1975, %vm1979
    %v1982 = vsel %vm1977, %v1752, -inf
    %1983 = vmax.xlane.f32.xlu0 %v1982
    %v1984 = vpop.xlane.xlu0 %1983
    %v1985 = vsub.f32 %v1982, %v1984
    %v1986 = vmul.f32 %v1985, 1.442695
    %v1987 = vpow.pop %v1986
    %1988 = vadd.xlane.f32.xlu0 %v1987
    %v1989 = vpop.xlane.xlu0 %1988
    %v1990 = vlog2.pop %v1989
    %v1991 = vmul.f32 %v1990, 0.6931472
    %v1992 = vadd.f32 %v1984, %v1991
    %v1993 = vsub.f32 %v1752, %v1992
    %v1994 = vmax.f32 %v1752, -5.0
    %v1995 = vmin.f32 %v1994, 5.0
    %v1996 = vsel %vm1980, %v1995, %v1752
    %v1997 = vsel %vm1977, %v1993, %v1996
    %v1998 = vsel %vm1981, %v1997, %v1968
    %1999 = vst [vmem:[#allocation11] sm:$0xff] %v1998
    // Predicated region
    $region42: #{tpu_custom_call.1} parent=1 // pred_check
      _
    $region43: #{tpu_custom_call.1} parent=1 // pred_check_branch
      %2001 = sbr.rel (0) target = $region45
    $region44: #{tpu_custom_call.1} parent=1 // pred_region
      %s2003 = ssub.s32 128, 128
      %2004 = vsyncadd [#allocation4], %s2003
      %s2006 = sshll.u32 [#allocation11], 4
      %s2007 = int_to_ptr.vmem [resolvable:$true] %s2006
      %2009 = dma.vmem_to_hbm [thread:$0]  %s2007, 128, %s5, [#allocation4]
    $region45: #{tpu_custom_call.1} parent=1 // pred_fallthru
      _
    // Predicated region
    $region46: #{tpu_custom_call.1} parent=1 // pred_check
      _
    $region47: #{tpu_custom_call.1} parent=1 // pred_check_branch
      %2011 = sbr.rel (0) target = $region49
    $region48: #{tpu_custom_call.1} parent=1 // pred_region
      %2012 = dma.done [#allocation4], 128
    $region49: #{tpu_custom_call.1} parent=1 // pred_fallthru
      _
    %2013 = vsyncpa [#allocation3], 1
    %2014 = vsyncpa [#allocation6], 1
    %2015 = vsyncpa [#allocation9], 1
    %2016 = vsyncpa [#allocation4], 1

</llo_original>
